<compile_context>
chip_gen: v5e
topology: v5e:2x2
jax: 0.10.0
libtpu: 0.0.40
codegen_flags: <defaults>
</compile_context>

<pallas_src>
import functools

import jax
import jax.numpy as jnp
from jax.experimental import pallas as pl
from jax.experimental.pallas import tpu as pltpu


# ----------------------------------------------------------------------------
# helpers
# ----------------------------------------------------------------------------
def _full_spec(shape):
    nd = len(shape)
    return pl.BlockSpec(shape, lambda *_, nd=nd: (0,) * nd)


# ----------------------------------------------------------------------------
# Single fused kernel: 4 GATs + state-rep + MoE + fusion + predNet
# ----------------------------------------------------------------------------
def _lamda_kernel(ek_ref, x2_ref, gatw_ref, gata_ref, adj_ref,
                  moew_ref, moeb_ref, counts_ref, resp_ref, kdiff_ref,
                  mlpw_ref, mlpb_ref, w1_ref, b1_ref, w2_ref, b2_ref,
                  out_ref, *, exer_n, k_dim, n_experts, batch):
    K = k_dim
    E = exer_n

    # ---------------- GraphEncoder: 4 GAT layers, one lane-dense matmul ------
    ek = ek_ref[...].astype(jnp.bfloat16)                            # [N, Din]
    z_all = jnp.dot(ek, gatw_ref[...],
                    preferred_element_type=jnp.float32)              # [N, 4K]
    # both attention projections of all 4 graphs in ONE matmul (block-diag a)
    s_all = jnp.dot(z_all.astype(jnp.bfloat16), gata_ref[...],
                    preferred_element_type=jnp.float32)              # [N, 8]

    outs = []
    for g in range(4):                                               # static unroll
        adj = adj_ref[g]                                             # [N, N] (dst, src)
        s_src_row = jnp.transpose(s_all[:, 2 * g:2 * g + 1])         # [1, N]
        # e[i, j] = a_dst . z[i] + a_src . z[j]
        e = s_all[:, 2 * g + 1:2 * g + 2] + s_src_row                # [N, N]
        e = jnp.where(adj > 0, e, -1e30)
        m = jnp.max(e, axis=-1, keepdims=True)
        p = jnp.exp(e - m) * adj
        denom = jnp.sum(p, axis=-1, keepdims=True)
        # zero-in-degree rows -> 0 output (DGL update_all default)
        alpha = p * pl.reciprocal(jnp.where(denom > 0, denom, 1.0), approx=True)
        # alpha and z kept in f32 for this tiny aggregation matmul (numerics)
        outs.append(jnp.dot(alpha, z_all[:, g * K:(g + 1) * K],
                            preferred_element_type=jnp.float32))     # [N, K]

    # Fusion (graph_layer == 1 path): knowledge nodes live at rows E:N
    kn_new = outs[0][E:] + outs[1][E:] + outs[2][E:]                 # [K, K]
    ex_new = outs[3][:E]                                             # [E, K]

    # --------------- state representation via count matrices -----------------
    counts = counts_ref[...]                                         # [B, E+K+2], pre-scaled 1/len
    sig_ex = jax.nn.sigmoid(ex_new)                                  # [E, K]
    sig_kn = jax.nn.sigmoid(kn_new)                                  # [K, K]
    sig_rp = jax.nn.sigmoid(resp_ref[...])                           # [2, K]
    state_q = jnp.dot(counts[:, :E], sig_ex, preferred_element_type=jnp.float32)
    state_k = jnp.dot(counts[:, E:E + K], sig_kn, preferred_element_type=jnp.float32)
    state_r = jnp.dot(counts[:, E + K:], sig_rp, preferred_element_type=jnp.float32)
    state = jnp.concatenate([state_q, state_k, state_r], axis=-1)    # [B, 3K]
    mlp_out = jnp.maximum(
        jnp.dot(state.astype(jnp.bfloat16), mlpw_ref[...],
                preferred_element_type=jnp.float32) + mlpb_ref[...], 0.0)  # [B, K]

    # --------------- MoE (gate folded into the expert matmul) ----------------
    # rows 0:B = student batch, rows B:2B = question batch
    x2 = x2_ref[...].astype(jnp.bfloat16)                            # [2B, Din]
    hg = jnp.dot(x2, moew_ref[...],
                 preferred_element_type=jnp.float32) + moeb_ref[...]  # [2B, 5K+5]
    logits = hg[:, n_experts * K:]                                   # [2B, 5] gate
    logits = logits - jnp.max(logits, axis=-1, keepdims=True)
    gexp = jnp.exp(logits)
    gate = gexp * pl.reciprocal(jnp.sum(gexp, axis=-1, keepdims=True), approx=True)
    h_all = hg[:, :n_experts * K]                                    # [2B, 5K] experts
    h_all = jnp.where(h_all > 0, h_all, 0.01 * h_all)                # LeakyReLU(0.01)
    moe = jnp.zeros((2 * batch, K), jnp.float32)
    for e in range(n_experts):                                       # static unroll
        moe = moe + gate[:, e:e + 1] * h_all[:, e * K:(e + 1) * K]

    # ------------------------ fusion + predNet head ---------------------------
    stu_input = moe[:batch] + mlp_out                                # [B, K]
    ques_input = moe[batch:] + jax.nn.sigmoid(kdiff_ref[...])        # [B, K]
    x = stu_input - ques_input
    h1 = jnp.maximum(
        jnp.dot(x.astype(jnp.bfloat16), w1_ref[...],
                preferred_element_type=jnp.float32) + b1_ref[...], 0.0)   # [B, 512]
    # TODO(synk): Dropout(p=0.2) in predNet omitted (inference-mode identity).
    logit = jnp.dot(h1.astype(jnp.bfloat16), w2_ref[...],
                    preferred_element_type=jnp.float32) + b2_ref[...]     # [B, 1]
    pred = jax.nn.sigmoid(logit)

    # single combined store: cols [0:K) = stu_input, cols [K:2K) = broadcast pred
    out_ref[...] = jnp.concatenate(
        [stu_input, jnp.broadcast_to(pred, (batch, K))], axis=-1)    # [B, 2K]


def lamda_fused(ek, x2, adj_stack, counts, kdiff, params, *,
                exer_n, k_dim, n_experts, batch):
    args = (ek, x2, params["gat_w"], params["gat_a"], adj_stack,
            params["moe_w"], params["moe_b"], counts, params["response_emb"], kdiff,
            params["mlp_w"], params["mlp_b"],
            params["pred_w1"], params["pred_b1"], params["pred_w2"], params["pred_b2"])
    return pl.pallas_call(
        functools.partial(_lamda_kernel, exer_n=exer_n, k_dim=k_dim,
                          n_experts=n_experts, batch=batch),
        grid=(1,),
        in_specs=[_full_spec(a.shape) for a in args],
        out_specs=_full_spec((batch, 2 * k_dim)),
        out_shape=jax.ShapeDtypeStruct((batch, 2 * k_dim), jnp.float32),
        compiler_params=pltpu.CompilerParams(dimension_semantics=("arbitrary",)),
    )(*args)


# ----------------------------------------------------------------------------
# LamdaNet forward (glue in plain JAX, single jit -> 1 custom call total)
# ----------------------------------------------------------------------------
@functools.partial(jax.jit, static_argnames=("exer_n",))
def lamdanet_forward(params, relation_map, seq_data,
                     stu_emb_raw, diag_emb_raw, ques_emb_raw, stu_id, exer_id,
                     *, exer_n):
    del diag_emb_raw  # unused in the reference forward
    kn_tbl = params["kn_emb"]       # [K, Din]
    exer_tbl = params["exer_emb"]   # [E, Din]
    knowledge_n = kn_tbl.shape[0]
    n_experts = params["moe_w"].shape[1] // (knowledge_n + 1)

    # node features: exercises first, then knowledge (the e_k graph layout)
    ek = jnp.concatenate([exer_tbl, kn_tbl], axis=0)                         # [E+K, Din]
    # directed / undirected K x K graphs placed at the bottom-right (knowledge) block
    adj_stack = jnp.stack([
        jnp.pad(relation_map["directed_g"], ((exer_n, 0), (exer_n, 0))),
        jnp.pad(relation_map["undirected_g"], ((exer_n, 0), (exer_n, 0))),
        relation_map["k_from_e"],
        relation_map["e_from_k"],
    ])                                                                       # [4, E+K, E+K]

    # --- get_state_representation: gathers replaced by (1/len)-scaled count matrices
    qids, resp, knids, seq_lens = (seq_data["qids"], seq_data["resp"],
                                   seq_data["knids"], seq_data["seq_lens"])
    b, s = qids.shape
    maskf = (jnp.arange(s)[None, :] < seq_lens[:, None]).astype(jnp.float32)  # [B, S]
    count_q = jnp.einsum("bs,bse->be", maskf,
                         jax.nn.one_hot(qids, exer_n, dtype=jnp.float32))     # [B, E]
    count_k = jnp.einsum("bs,bsk->bk", maskf,
                         jax.nn.one_hot(knids, knowledge_n, dtype=jnp.float32))  # [B, K]
    count_r = jnp.einsum("bs,bsr->br", maskf,
                         jax.nn.one_hot(resp, 2, dtype=jnp.float32))          # [B, 2]
    inv_len = 1.0 / seq_lens.astype(jnp.float32)
    counts = jnp.concatenate([count_q, count_k, count_r], axis=-1) * inv_len[:, None]

    kdiff_raw = params["k_difficulty"][exer_id]                               # [B, K]

    # stu_emb = sigmoid(student_emb(stu_id)) is dead code in the reference forward.
    _ = jax.nn.sigmoid(params["student_emb"][stu_id])

    # MoE runs once on the stacked [2B, Din] batch (student rows then question rows)
    x2 = jnp.concatenate([stu_emb_raw, ques_emb_raw], axis=0)                 # [2B, Din]

    fused = lamda_fused(ek, x2, adj_stack, counts, kdiff_raw, params,
                        exer_n=exer_n, k_dim=knowledge_n,
                        n_experts=n_experts, batch=b)                         # [B, 2K]
    k = knowledge_n
    stu_input = fused[:, :k]
    output_1 = fused[:, k]
    return output_1, stu_input


# ----------------------------------------------------------------------------
# deterministic parameter / data construction
# ----------------------------------------------------------------------------
def _xavier(key, shape):
    fan_in, fan_out = shape[-2], shape[-1]
    std = (2.0 / (fan_in + fan_out)) ** 0.5
    return std * jax.random.normal(key, shape, jnp.float32)


def init_everything(key, *, knowledge_n, exer_n, student_n, input_dim,
                    n_experts, batch, seq_len, pred_hidden):
    keys = iter(jax.random.split(key, 64))
    nxt = lambda: next(keys)
    k = knowledge_n

    # 4 GraphLayers packed lane-dense:
    #   gat_w [Din, 4K] : cols g*K:(g+1)*K = fc weight of graph g (stored [in, out])
    #   gat_a [4K, 8]   : block-diag; rows g*K:(g+1)*K, col 2g = a_src_g, col 2g+1 = a_dst_g
    w_blocks = []
    a_bd = jnp.zeros((4 * k, 8), jnp.float32)
    for g in range(4):  # order = [directed, undirected, k_from_e, e_from_k]
        w = _xavier(nxt(), (input_dim, k))
        a = _xavier(nxt(), (1, 2 * k))
        w_blocks.append(w)
        a_bd = a_bd.at[g * k:(g + 1) * k, 2 * g].set(a[0, :k])
        a_bd = a_bd.at[g * k:(g + 1) * k, 2 * g + 1].set(a[0, k:])
    gat_w = jnp.concatenate(w_blocks, axis=1)                                 # [Din, 4K]

    # MoE: 5 experts + gate folded into ONE [Din, 5K+5] matrix (experts first, gate last)
    expert_w = _xavier(nxt(), (n_experts, input_dim, k))
    gate_w = _xavier(nxt(), (input_dim, n_experts))
    moe_w = jnp.concatenate(
        [jnp.transpose(expert_w, (1, 0, 2)).reshape(input_dim, n_experts * k), gate_w],
        axis=1)                                                               # [Din, 5K+5]
    moe_b = jnp.zeros((1, n_experts * k + n_experts), jnp.float32)

    params = {
        "kn_emb": 0.05 * jax.random.normal(nxt(), (k, input_dim), jnp.float32),
        "exer_emb": 0.05 * jax.random.normal(nxt(), (exer_n, input_dim), jnp.float32),
        "student_emb": _xavier(nxt(), (student_n, k)),
        "k_difficulty": _xavier(nxt(), (exer_n, k)),
        "response_emb": _xavier(nxt(), (2, k)),
        # matmul weights stored bf16 (halved DMA bytes, no in-kernel casts); f32 accumulate
        "gat_w": gat_w.astype(jnp.bfloat16),
        "gat_a": a_bd.astype(jnp.bfloat16),
        "moe_w": moe_w.astype(jnp.bfloat16),
        "moe_b": moe_b,
        "mlp_w": _xavier(nxt(), (3 * k, k)).astype(jnp.bfloat16),
        "mlp_b": jnp.zeros((1, k), jnp.float32),
        "pred_w1": _xavier(nxt(), (k, pred_hidden)).astype(jnp.bfloat16),
        "pred_b1": jnp.zeros((1, pred_hidden), jnp.float32),
        "pred_w2": _xavier(nxt(), (pred_hidden, 1)).astype(jnp.bfloat16),
        "pred_b2": jnp.zeros((1, 1), jnp.float32),
    }

    n_all = exer_n + knowledge_n
    eye_k = jnp.eye(knowledge_n, dtype=jnp.float32)
    adj_dir = jnp.maximum(
        jax.random.bernoulli(nxt(), 0.3, (knowledge_n, knowledge_n)).astype(jnp.float32), eye_k)
    a = jax.random.bernoulli(nxt(), 0.3, (knowledge_n, knowledge_n)).astype(jnp.float32)
    adj_undir = jnp.maximum(jnp.maximum(a, a.T), eye_k)
    kfe_block = jax.random.bernoulli(nxt(), 0.4, (knowledge_n, exer_n)).astype(jnp.float32)
    adj_kfe = jnp.zeros((n_all, n_all), jnp.float32).at[exer_n:, :exer_n].set(kfe_block)
    efk_block = jax.random.bernoulli(nxt(), 0.4, (exer_n, knowledge_n)).astype(jnp.float32)
    adj_efk = jnp.zeros((n_all, n_all), jnp.float32).at[:exer_n, exer_n:].set(efk_block)
    relation_map = {"directed_g": adj_dir, "undirected_g": adj_undir,
                    "k_from_e": adj_kfe, "e_from_k": adj_efk}

    # synthetic encode_info / encode_score / encode_kn (replaces JSON files)
    seq_data = {
        "qids": jax.random.randint(nxt(), (batch, seq_len), 0, exer_n, jnp.int32),
        "resp": jax.random.randint(nxt(), (batch, seq_len), 0, 2, jnp.int32),
        "knids": jax.random.randint(nxt(), (batch, seq_len), 0, knowledge_n, jnp.int32),
        "seq_lens": jnp.array([seq_len, 5, 7, 3][:batch], jnp.int32),
    }

    inputs = {
        "stu_emb_raw": jax.random.normal(nxt(), (batch, input_dim), jnp.float32),
        "diag_emb_raw": jax.random.normal(nxt(), (batch, input_dim), jnp.float32),
        "ques_emb_raw": jax.random.normal(nxt(), (batch, input_dim), jnp.float32),
        "stu_id": jnp.arange(batch, dtype=jnp.int32) % student_n,
        "exer_id": (3 * jnp.arange(batch, dtype=jnp.int32) + 1) % exer_n,
    }
    return params, relation_map, seq_data, inputs


# ----------------------------------------------------------------------------
if __name__ == "__main__":
    KNOWLEDGE_N = 32     # n_knowledge (also GAT / MoE output dim)
    EXER_N = 16
    STUDENT_N = 8
    INPUT_DIM = 384      # args.llm == 'bert'
    N_EXPERTS = 5
    BATCH = 4
    SEQ_LEN = 8
    PRED_HIDDEN = 512

    key = jax.random.PRNGKey(0)
    params, relation_map, seq_data, inputs = init_everything(
        key, knowledge_n=KNOWLEDGE_N, exer_n=EXER_N, student_n=STUDENT_N,
        input_dim=INPUT_DIM, n_experts=N_EXPERTS, batch=BATCH,
        seq_len=SEQ_LEN, pred_hidden=PRED_HIDDEN)

    output_1, stu_input = lamdanet_forward(
        params, relation_map, seq_data,
        inputs["stu_emb_raw"], inputs["diag_emb_raw"], inputs["ques_emb_raw"],
        inputs["stu_id"], inputs["exer_id"], exer_n=EXER_N)

    jax.block_until_ready((output_1, stu_input))
    assert output_1.shape == (BATCH,)
    assert stu_input.shape == (BATCH, KNOWLEDGE_N)
    assert bool(jnp.all(jnp.isfinite(output_1))) and bool(jnp.all(jnp.isfinite(stu_input)))
    print("KERNEL_OK")
</pallas_src>

<mosaic_0001>
module attributes {stable_mosaic.version = 11 : i64} {
  func.func @_lamda_kernel(%arg0: i32, %arg1: memref<48x384xf32, #tpu.memory_space<vmem>>, %arg2: memref<8x384xf32, #tpu.memory_space<vmem>>, %arg3: memref<384x128xbf16, #tpu.memory_space<vmem>>, %arg4: memref<128x8xbf16, #tpu.memory_space<vmem>>, %arg5: memref<4x48x48xf32, #tpu.memory_space<vmem>>, %arg6: memref<384x165xbf16, #tpu.memory_space<vmem>>, %arg7: memref<1x165xf32, #tpu.memory_space<vmem>>, %arg8: memref<4x50xf32, #tpu.memory_space<vmem>>, %arg9: memref<2x32xf32, #tpu.memory_space<vmem>>, %arg10: memref<4x32xf32, #tpu.memory_space<vmem>>, %arg11: memref<96x32xbf16, #tpu.memory_space<vmem>>, %arg12: memref<1x32xf32, #tpu.memory_space<vmem>>, %arg13: memref<32x512xbf16, #tpu.memory_space<vmem>>, %arg14: memref<1x512xf32, #tpu.memory_space<vmem>>, %arg15: memref<512x1xbf16, #tpu.memory_space<vmem>>, %arg16: memref<1x1xf32, #tpu.memory_space<vmem>>, %arg17: memref<4x64xf32, #tpu.memory_space<vmem>>) attributes {dimension_semantics = [#tpu.dimension_semantics<arbitrary>], iteration_bounds = array<i64: 1>, scalar_prefetch = 0 : i64, scratch_operands = 0 : i64, tpu.core_type = #tpu.core_type<tc>, window_params = [{pipeline_mode = #tpu.pipeline_mode<synchronous>, transform_indices = @transform_0, window_bounds = array<i64: 48, 384>}, {pipeline_mode = #tpu.pipeline_mode<synchronous>, transform_indices = @transform_1, window_bounds = array<i64: 8, 384>}, {pipeline_mode = #tpu.pipeline_mode<synchronous>, transform_indices = @transform_2, window_bounds = array<i64: 384, 128>}, {pipeline_mode = #tpu.pipeline_mode<synchronous>, transform_indices = @transform_3, window_bounds = array<i64: 128, 8>}, {pipeline_mode = #tpu.pipeline_mode<synchronous>, transform_indices = @transform_4, window_bounds = array<i64: 4, 48, 48>}, {pipeline_mode = #tpu.pipeline_mode<synchronous>, transform_indices = @transform_5, window_bounds = array<i64: 384, 165>}, {pipeline_mode = #tpu.pipeline_mode<synchronous>, transform_indices = @transform_6, window_bounds = array<i64: 1, 165>}, {pipeline_mode = #tpu.pipeline_mode<synchronous>, transform_indices = @transform_7, window_bounds = array<i64: 4, 50>}, {pipeline_mode = #tpu.pipeline_mode<synchronous>, transform_indices = @transform_8, window_bounds = array<i64: 2, 32>}, {pipeline_mode = #tpu.pipeline_mode<synchronous>, transform_indices = @transform_9, window_bounds = array<i64: 4, 32>}, {pipeline_mode = #tpu.pipeline_mode<synchronous>, transform_indices = @transform_10, window_bounds = array<i64: 96, 32>}, {pipeline_mode = #tpu.pipeline_mode<synchronous>, transform_indices = @transform_11, window_bounds = array<i64: 1, 32>}, {pipeline_mode = #tpu.pipeline_mode<synchronous>, transform_indices = @transform_12, window_bounds = array<i64: 32, 512>}, {pipeline_mode = #tpu.pipeline_mode<synchronous>, transform_indices = @transform_13, window_bounds = array<i64: 1, 512>}, {pipeline_mode = #tpu.pipeline_mode<synchronous>, transform_indices = @transform_14, window_bounds = array<i64: 512, 1>}, {pipeline_mode = #tpu.pipeline_mode<synchronous>, transform_indices = @transform_15, window_bounds = array<i64: 1, 1>}, {pipeline_mode = #tpu.pipeline_mode<synchronous>, transform_indices = @transform_16, window_bounds = array<i64: 4, 64>}]} {
    %c0 = arith.constant 0 : index
    %c0_0 = arith.constant 0 : index
    %0 = vector.load %arg1[%c0, %c0_0] : memref<48x384xf32, #tpu.memory_space<vmem>>, vector<48x384xf32>
    %1 = arith.truncf %0 : vector<48x384xf32> to vector<48x384xbf16>
    %c0_1 = arith.constant 0 : index
    %c0_2 = arith.constant 0 : index
    %2 = vector.load %arg3[%c0_1, %c0_2] : memref<384x128xbf16, #tpu.memory_space<vmem>>, vector<384x128xbf16>
    %cst = arith.constant dense<0.000000e+00> : vector<48x128xf32>
    %3 = tpu.matmul %1, %2, %cst {dimension_numbers = #tpu.dot_dimension_numbers<[1], [0], [0], [1], [0, 0, 1, 1], [], []>} : vector<48x384xbf16>, vector<384x128xbf16>, vector<48x128xf32> -> vector<48x128xf32>
    %4 = arith.truncf %3 : vector<48x128xf32> to vector<48x128xbf16>
    %c0_3 = arith.constant 0 : index
    %c0_4 = arith.constant 0 : index
    %5 = vector.load %arg4[%c0_3, %c0_4] : memref<128x8xbf16, #tpu.memory_space<vmem>>, vector<128x8xbf16>
    %cst_5 = arith.constant dense<0.000000e+00> : vector<48x8xf32>
    %6 = tpu.matmul %4, %5, %cst_5 {dimension_numbers = #tpu.dot_dimension_numbers<[1], [0], [0], [1], [0, 0, 1, 1], [], []>} : vector<48x128xbf16>, vector<128x8xbf16>, vector<48x8xf32> -> vector<48x8xf32>
    %c0_6 = arith.constant 0 : index
    %c0_7 = arith.constant 0 : index
    %c0_8 = arith.constant 0 : index
    %7 = vector.load %arg5[%c0_6, %c0_7, %c0_8] : memref<4x48x48xf32, #tpu.memory_space<vmem>>, vector<1x48x48xf32>
    %8 = vector.shape_cast %7 : vector<1x48x48xf32> to vector<48x48xf32>
    %9 = vector.extract_strided_slice %6 {offsets = [0, 0], sizes = [48, 1], strides = [1, 1]} : vector<48x8xf32> to vector<48x1xf32>
    %10 = tpu.transpose %9, [1, 0] : vector<48x1xf32> -> vector<1x48xf32>
    %11 = vector.extract_strided_slice %6 {offsets = [0, 1], sizes = [48, 1], strides = [1, 1]} : vector<48x8xf32> to vector<48x1xf32>
    %12 = vector.broadcast %11 : vector<48x1xf32> to vector<48x48xf32>
    %13 = vector.broadcast %10 : vector<1x48xf32> to vector<48x48xf32>
    %14 = arith.addf %12, %13 : vector<48x48xf32>
    %cst_9 = arith.constant 0.000000e+00 : f32
    %15 = vector.broadcast %cst_9 : f32 to vector<48x48xf32>
    %16 = arith.cmpf ogt, %8, %15 : vector<48x48xf32>
    %cst_10 = arith.constant -1.000000e+30 : f32
    %17 = vector.broadcast %cst_10 : f32 to vector<48x48xf32>
    %18 = arith.select %16, %14, %17 : vector<48x48xi1>, vector<48x48xf32>
    %cst_11 = arith.constant dense<0xFF800000> : vector<48xf32>
    %19 = vector.multi_reduction <maximumf>, %18, %cst_11 [1] : vector<48x48xf32> to vector<48xf32>
    %20 = vector.shape_cast %19 : vector<48xf32> to vector<48x1xf32>
    %21 = vector.broadcast %20 : vector<48x1xf32> to vector<48x48xf32>
    %22 = arith.subf %18, %21 : vector<48x48xf32>
    %23 = math.exp %22 : vector<48x48xf32>
    %24 = arith.mulf %23, %8 : vector<48x48xf32>
    %cst_12 = arith.constant dense<0.000000e+00> : vector<48xf32>
    %25 = vector.multi_reduction <add>, %24, %cst_12 [1] : vector<48x48xf32> to vector<48xf32>
    %26 = vector.shape_cast %25 : vector<48xf32> to vector<48x1xf32>
    %cst_13 = arith.constant 0.000000e+00 : f32
    %27 = vector.broadcast %cst_13 : f32 to vector<48x1xf32>
    %28 = arith.cmpf ogt, %26, %27 : vector<48x1xf32>
    %cst_14 = arith.constant 1.000000e+00 : f32
    %29 = vector.broadcast %cst_14 : f32 to vector<48x1xf32>
    %30 = arith.select %28, %26, %29 : vector<48x1xi1>, vector<48x1xf32>
    %31 = tpu.reciprocal %30 {approx = true} : vector<48x1xf32> -> vector<48x1xf32>
    %32 = vector.broadcast %31 : vector<48x1xf32> to vector<48x48xf32>
    %33 = arith.mulf %24, %32 : vector<48x48xf32>
    %34 = vector.extract_strided_slice %3 {offsets = [0, 0], sizes = [48, 32], strides = [1, 1]} : vector<48x128xf32> to vector<48x32xf32>
    %cst_15 = arith.constant dense<0.000000e+00> : vector<48x32xf32>
    %35 = tpu.matmul %33, %34, %cst_15 {dimension_numbers = #tpu.dot_dimension_numbers<[1], [0], [0], [1], [0, 0, 1, 1], [], []>} : vector<48x48xf32>, vector<48x32xf32>, vector<48x32xf32> -> vector<48x32xf32>
    %c1 = arith.constant 1 : index
    %c0_16 = arith.constant 0 : index
    %c0_17 = arith.constant 0 : index
    %36 = vector.load %arg5[%c1, %c0_16, %c0_17] : memref<4x48x48xf32, #tpu.memory_space<vmem>>, vector<1x48x48xf32>
    %37 = vector.shape_cast %36 : vector<1x48x48xf32> to vector<48x48xf32>
    %38 = vector.extract_strided_slice %6 {offsets = [0, 2], sizes = [48, 1], strides = [1, 1]} : vector<48x8xf32> to vector<48x1xf32>
    %39 = tpu.transpose %38, [1, 0] : vector<48x1xf32> -> vector<1x48xf32>
    %40 = vector.extract_strided_slice %6 {offsets = [0, 3], sizes = [48, 1], strides = [1, 1]} : vector<48x8xf32> to vector<48x1xf32>
    %41 = vector.broadcast %40 : vector<48x1xf32> to vector<48x48xf32>
    %42 = vector.broadcast %39 : vector<1x48xf32> to vector<48x48xf32>
    %43 = arith.addf %41, %42 : vector<48x48xf32>
    %cst_18 = arith.constant 0.000000e+00 : f32
    %44 = vector.broadcast %cst_18 : f32 to vector<48x48xf32>
    %45 = arith.cmpf ogt, %37, %44 : vector<48x48xf32>
    %cst_19 = arith.constant -1.000000e+30 : f32
    %46 = vector.broadcast %cst_19 : f32 to vector<48x48xf32>
    %47 = arith.select %45, %43, %46 : vector<48x48xi1>, vector<48x48xf32>
    %cst_20 = arith.constant dense<0xFF800000> : vector<48xf32>
    %48 = vector.multi_reduction <maximumf>, %47, %cst_20 [1] : vector<48x48xf32> to vector<48xf32>
    %49 = vector.shape_cast %48 : vector<48xf32> to vector<48x1xf32>
    %50 = vector.broadcast %49 : vector<48x1xf32> to vector<48x48xf32>
    %51 = arith.subf %47, %50 : vector<48x48xf32>
    %52 = math.exp %51 : vector<48x48xf32>
    %53 = arith.mulf %52, %37 : vector<48x48xf32>
    %cst_21 = arith.constant dense<0.000000e+00> : vector<48xf32>
    %54 = vector.multi_reduction <add>, %53, %cst_21 [1] : vector<48x48xf32> to vector<48xf32>
    %55 = vector.shape_cast %54 : vector<48xf32> to vector<48x1xf32>
    %cst_22 = arith.constant 0.000000e+00 : f32
    %56 = vector.broadcast %cst_22 : f32 to vector<48x1xf32>
    %57 = arith.cmpf ogt, %55, %56 : vector<48x1xf32>
    %cst_23 = arith.constant 1.000000e+00 : f32
    %58 = vector.broadcast %cst_23 : f32 to vector<48x1xf32>
    %59 = arith.select %57, %55, %58 : vector<48x1xi1>, vector<48x1xf32>
    %60 = tpu.reciprocal %59 {approx = true} : vector<48x1xf32> -> vector<48x1xf32>
    %61 = vector.broadcast %60 : vector<48x1xf32> to vector<48x48xf32>
    %62 = arith.mulf %53, %61 : vector<48x48xf32>
    %63 = vector.extract_strided_slice %3 {offsets = [0, 32], sizes = [48, 32], strides = [1, 1]} : vector<48x128xf32> to vector<48x32xf32>
    %cst_24 = arith.constant dense<0.000000e+00> : vector<48x32xf32>
    %64 = tpu.matmul %62, %63, %cst_24 {dimension_numbers = #tpu.dot_dimension_numbers<[1], [0], [0], [1], [0, 0, 1, 1], [], []>} : vector<48x48xf32>, vector<48x32xf32>, vector<48x32xf32> -> vector<48x32xf32>
    %c2 = arith.constant 2 : index
    %c0_25 = arith.constant 0 : index
    %c0_26 = arith.constant 0 : index
    %65 = vector.load %arg5[%c2, %c0_25, %c0_26] : memref<4x48x48xf32, #tpu.memory_space<vmem>>, vector<1x48x48xf32>
    %66 = vector.shape_cast %65 : vector<1x48x48xf32> to vector<48x48xf32>
    %67 = vector.extract_strided_slice %6 {offsets = [0, 4], sizes = [48, 1], strides = [1, 1]} : vector<48x8xf32> to vector<48x1xf32>
    %68 = tpu.transpose %67, [1, 0] : vector<48x1xf32> -> vector<1x48xf32>
    %69 = vector.extract_strided_slice %6 {offsets = [0, 5], sizes = [48, 1], strides = [1, 1]} : vector<48x8xf32> to vector<48x1xf32>
    %70 = vector.broadcast %69 : vector<48x1xf32> to vector<48x48xf32>
    %71 = vector.broadcast %68 : vector<1x48xf32> to vector<48x48xf32>
    %72 = arith.addf %70, %71 : vector<48x48xf32>
    %cst_27 = arith.constant 0.000000e+00 : f32
    %73 = vector.broadcast %cst_27 : f32 to vector<48x48xf32>
    %74 = arith.cmpf ogt, %66, %73 : vector<48x48xf32>
    %cst_28 = arith.constant -1.000000e+30 : f32
    %75 = vector.broadcast %cst_28 : f32 to vector<48x48xf32>
    %76 = arith.select %74, %72, %75 : vector<48x48xi1>, vector<48x48xf32>
    %cst_29 = arith.constant dense<0xFF800000> : vector<48xf32>
    %77 = vector.multi_reduction <maximumf>, %76, %cst_29 [1] : vector<48x48xf32> to vector<48xf32>
    %78 = vector.shape_cast %77 : vector<48xf32> to vector<48x1xf32>
    %79 = vector.broadcast %78 : vector<48x1xf32> to vector<48x48xf32>
    %80 = arith.subf %76, %79 : vector<48x48xf32>
    %81 = math.exp %80 : vector<48x48xf32>
    %82 = arith.mulf %81, %66 : vector<48x48xf32>
    %cst_30 = arith.constant dense<0.000000e+00> : vector<48xf32>
    %83 = vector.multi_reduction <add>, %82, %cst_30 [1] : vector<48x48xf32> to vector<48xf32>
    %84 = vector.shape_cast %83 : vector<48xf32> to vector<48x1xf32>
    %cst_31 = arith.constant 0.000000e+00 : f32
    %85 = vector.broadcast %cst_31 : f32 to vector<48x1xf32>
    %86 = arith.cmpf ogt, %84, %85 : vector<48x1xf32>
    %cst_32 = arith.constant 1.000000e+00 : f32
    %87 = vector.broadcast %cst_32 : f32 to vector<48x1xf32>
    %88 = arith.select %86, %84, %87 : vector<48x1xi1>, vector<48x1xf32>
    %89 = tpu.reciprocal %88 {approx = true} : vector<48x1xf32> -> vector<48x1xf32>
    %90 = vector.broadcast %89 : vector<48x1xf32> to vector<48x48xf32>
    %91 = arith.mulf %82, %90 : vector<48x48xf32>
    %92 = vector.extract_strided_slice %3 {offsets = [0, 64], sizes = [48, 32], strides = [1, 1]} : vector<48x128xf32> to vector<48x32xf32>
    %cst_33 = arith.constant dense<0.000000e+00> : vector<48x32xf32>
    %93 = tpu.matmul %91, %92, %cst_33 {dimension_numbers = #tpu.dot_dimension_numbers<[1], [0], [0], [1], [0, 0, 1, 1], [], []>} : vector<48x48xf32>, vector<48x32xf32>, vector<48x32xf32> -> vector<48x32xf32>
    %c3 = arith.constant 3 : index
    %c0_34 = arith.constant 0 : index
    %c0_35 = arith.constant 0 : index
    %94 = vector.load %arg5[%c3, %c0_34, %c0_35] : memref<4x48x48xf32, #tpu.memory_space<vmem>>, vector<1x48x48xf32>
    %95 = vector.shape_cast %94 : vector<1x48x48xf32> to vector<48x48xf32>
    %96 = vector.extract_strided_slice %6 {offsets = [0, 6], sizes = [48, 1], strides = [1, 1]} : vector<48x8xf32> to vector<48x1xf32>
    %97 = tpu.transpose %96, [1, 0] : vector<48x1xf32> -> vector<1x48xf32>
    %98 = vector.extract_strided_slice %6 {offsets = [0, 7], sizes = [48, 1], strides = [1, 1]} : vector<48x8xf32> to vector<48x1xf32>
    %99 = vector.broadcast %98 : vector<48x1xf32> to vector<48x48xf32>
    %100 = vector.broadcast %97 : vector<1x48xf32> to vector<48x48xf32>
    %101 = arith.addf %99, %100 : vector<48x48xf32>
    %cst_36 = arith.constant 0.000000e+00 : f32
    %102 = vector.broadcast %cst_36 : f32 to vector<48x48xf32>
    %103 = arith.cmpf ogt, %95, %102 : vector<48x48xf32>
    %cst_37 = arith.constant -1.000000e+30 : f32
    %104 = vector.broadcast %cst_37 : f32 to vector<48x48xf32>
    %105 = arith.select %103, %101, %104 : vector<48x48xi1>, vector<48x48xf32>
    %cst_38 = arith.constant dense<0xFF800000> : vector<48xf32>
    %106 = vector.multi_reduction <maximumf>, %105, %cst_38 [1] : vector<48x48xf32> to vector<48xf32>
    %107 = vector.shape_cast %106 : vector<48xf32> to vector<48x1xf32>
    %108 = vector.broadcast %107 : vector<48x1xf32> to vector<48x48xf32>
    %109 = arith.subf %105, %108 : vector<48x48xf32>
    %110 = math.exp %109 : vector<48x48xf32>
    %111 = arith.mulf %110, %95 : vector<48x48xf32>
    %cst_39 = arith.constant dense<0.000000e+00> : vector<48xf32>
    %112 = vector.multi_reduction <add>, %111, %cst_39 [1] : vector<48x48xf32> to vector<48xf32>
    %113 = vector.shape_cast %112 : vector<48xf32> to vector<48x1xf32>
    %cst_40 = arith.constant 0.000000e+00 : f32
    %114 = vector.broadcast %cst_40 : f32 to vector<48x1xf32>
    %115 = arith.cmpf ogt, %113, %114 : vector<48x1xf32>
    %cst_41 = arith.constant 1.000000e+00 : f32
    %116 = vector.broadcast %cst_41 : f32 to vector<48x1xf32>
    %117 = arith.select %115, %113, %116 : vector<48x1xi1>, vector<48x1xf32>
    %118 = tpu.reciprocal %117 {approx = true} : vector<48x1xf32> -> vector<48x1xf32>
    %119 = vector.broadcast %118 : vector<48x1xf32> to vector<48x48xf32>
    %120 = arith.mulf %111, %119 : vector<48x48xf32>
    %121 = vector.extract_strided_slice %3 {offsets = [0, 96], sizes = [48, 32], strides = [1, 1]} : vector<48x128xf32> to vector<48x32xf32>
    %cst_42 = arith.constant dense<0.000000e+00> : vector<48x32xf32>
    %122 = tpu.matmul %120, %121, %cst_42 {dimension_numbers = #tpu.dot_dimension_numbers<[1], [0], [0], [1], [0, 0, 1, 1], [], []>} : vector<48x48xf32>, vector<48x32xf32>, vector<48x32xf32> -> vector<48x32xf32>
    %123 = vector.extract_strided_slice %35 {offsets = [16, 0], sizes = [32, 32], strides = [1, 1]} : vector<48x32xf32> to vector<32x32xf32>
    %124 = vector.extract_strided_slice %64 {offsets = [16, 0], sizes = [32, 32], strides = [1, 1]} : vector<48x32xf32> to vector<32x32xf32>
    %125 = arith.addf %123, %124 : vector<32x32xf32>
    %126 = vector.extract_strided_slice %93 {offsets = [16, 0], sizes = [32, 32], strides = [1, 1]} : vector<48x32xf32> to vector<32x32xf32>
    %127 = arith.addf %125, %126 : vector<32x32xf32>
    %128 = vector.extract_strided_slice %122 {offsets = [0, 0], sizes = [16, 32], strides = [1, 1]} : vector<48x32xf32> to vector<16x32xf32>
    %c0_43 = arith.constant 0 : index
    %c0_44 = arith.constant 0 : index
    %129 = vector.load %arg8[%c0_43, %c0_44] : memref<4x50xf32, #tpu.memory_space<vmem>>, vector<4x50xf32>
    %130 = arith.negf %128 : vector<16x32xf32>
    %131 = math.exp %130 : vector<16x32xf32>
    %cst_45 = arith.constant 1.000000e+00 : f32
    %132 = vector.broadcast %cst_45 : f32 to vector<16x32xf32>
    %133 = arith.addf %132, %131 : vector<16x32xf32>
    %134 = arith.divf %132, %133 : vector<16x32xf32>
    %135 = arith.negf %127 : vector<32x32xf32>
    %136 = math.exp %135 : vector<32x32xf32>
    %cst_46 = arith.constant 1.000000e+00 : f32
    %137 = vector.broadcast %cst_46 : f32 to vector<32x32xf32>
    %138 = arith.addf %137, %136 : vector<32x32xf32>
    %139 = arith.divf %137, %138 : vector<32x32xf32>
    %c0_47 = arith.constant 0 : index
    %c0_48 = arith.constant 0 : index
    %140 = vector.load %arg9[%c0_47, %c0_48] : memref<2x32xf32, #tpu.memory_space<vmem>>, vector<2x32xf32>
    %141 = arith.negf %140 : vector<2x32xf32>
    %142 = math.exp %141 : vector<2x32xf32>
    %cst_49 = arith.constant 1.000000e+00 : f32
    %143 = vector.broadcast %cst_49 : f32 to vector<2x32xf32>
    %144 = arith.addf %143, %142 : vector<2x32xf32>
    %145 = arith.divf %143, %144 : vector<2x32xf32>
    %146 = vector.extract_strided_slice %129 {offsets = [0, 0], sizes = [4, 16], strides = [1, 1]} : vector<4x50xf32> to vector<4x16xf32>
    %cst_50 = arith.constant dense<0.000000e+00> : vector<4x32xf32>
    %147 = tpu.matmul %146, %134, %cst_50 {dimension_numbers = #tpu.dot_dimension_numbers<[1], [0], [0], [1], [0, 0, 1, 1], [], []>} : vector<4x16xf32>, vector<16x32xf32>, vector<4x32xf32> -> vector<4x32xf32>
    %148 = vector.extract_strided_slice %129 {offsets = [0, 16], sizes = [4, 32], strides = [1, 1]} : vector<4x50xf32> to vector<4x32xf32>
    %cst_51 = arith.constant dense<0.000000e+00> : vector<4x32xf32>
    %149 = tpu.matmul %148, %139, %cst_51 {dimension_numbers = #tpu.dot_dimension_numbers<[1], [0], [0], [1], [0, 0, 1, 1], [], []>} : vector<4x32xf32>, vector<32x32xf32>, vector<4x32xf32> -> vector<4x32xf32>
    %150 = vector.extract_strided_slice %129 {offsets = [0, 48], sizes = [4, 2], strides = [1, 1]} : vector<4x50xf32> to vector<4x2xf32>
    %cst_52 = arith.constant dense<0.000000e+00> : vector<4x32xf32>
    %151 = tpu.matmul %150, %145, %cst_52 {dimension_numbers = #tpu.dot_dimension_numbers<[1], [0], [0], [1], [0, 0, 1, 1], [], []>} : vector<4x2xf32>, vector<2x32xf32>, vector<4x32xf32> -> vector<4x32xf32>
    %152 = tpu.concatenate %147, %149, %151 in 1 : vector<4x32xf32>, vector<4x32xf32>, vector<4x32xf32> -> vector<4x96xf32>
    %153 = arith.truncf %152 : vector<4x96xf32> to vector<4x96xbf16>
    %c0_53 = arith.constant 0 : index
    %c0_54 = arith.constant 0 : index
    %154 = vector.load %arg11[%c0_53, %c0_54] : memref<96x32xbf16, #tpu.memory_space<vmem>>, vector<96x32xbf16>
    %cst_55 = arith.constant dense<0.000000e+00> : vector<4x32xf32>
    %155 = tpu.matmul %153, %154, %cst_55 {dimension_numbers = #tpu.dot_dimension_numbers<[1], [0], [0], [1], [0, 0, 1, 1], [], []>} : vector<4x96xbf16>, vector<96x32xbf16>, vector<4x32xf32> -> vector<4x32xf32>
    %c0_56 = arith.constant 0 : index
    %c0_57 = arith.constant 0 : index
    %156 = vector.load %arg12[%c0_56, %c0_57] : memref<1x32xf32, #tpu.memory_space<vmem>>, vector<1x32xf32>
    %157 = vector.broadcast %156 : vector<1x32xf32> to vector<4x32xf32>
    %158 = arith.addf %155, %157 : vector<4x32xf32>
    %cst_58 = arith.constant 0.000000e+00 : f32
    %159 = vector.broadcast %cst_58 : f32 to vector<4x32xf32>
    %160 = arith.maximumf %158, %159 : vector<4x32xf32>
    %c0_59 = arith.constant 0 : index
    %c0_60 = arith.constant 0 : index
    %161 = vector.load %arg2[%c0_59, %c0_60] : memref<8x384xf32, #tpu.memory_space<vmem>>, vector<8x384xf32>
    %162 = arith.truncf %161 : vector<8x384xf32> to vector<8x384xbf16>
    %c0_61 = arith.constant 0 : index
    %c0_62 = arith.constant 0 : index
    %163 = vector.load %arg6[%c0_61, %c0_62] : memref<384x165xbf16, #tpu.memory_space<vmem>>, vector<384x165xbf16>
    %cst_63 = arith.constant dense<0.000000e+00> : vector<8x165xf32>
    %164 = tpu.matmul %162, %163, %cst_63 {dimension_numbers = #tpu.dot_dimension_numbers<[1], [0], [0], [1], [0, 0, 1, 1], [], []>} : vector<8x384xbf16>, vector<384x165xbf16>, vector<8x165xf32> -> vector<8x165xf32>
    %c0_64 = arith.constant 0 : index
    %c0_65 = arith.constant 0 : index
    %165 = vector.load %arg7[%c0_64, %c0_65] : memref<1x165xf32, #tpu.memory_space<vmem>>, vector<1x165xf32>
    %166 = vector.broadcast %165 : vector<1x165xf32> to vector<8x165xf32>
    %167 = arith.addf %164, %166 : vector<8x165xf32>
    %168 = vector.extract_strided_slice %167 {offsets = [0, 160], sizes = [8, 5], strides = [1, 1]} : vector<8x165xf32> to vector<8x5xf32>
    %cst_66 = arith.constant dense<0xFF800000> : vector<8xf32>
    %169 = vector.multi_reduction <maximumf>, %168, %cst_66 [1] : vector<8x5xf32> to vector<8xf32>
    %170 = vector.shape_cast %169 : vector<8xf32> to vector<8x1xf32>
    %171 = vector.broadcast %170 : vector<8x1xf32> to vector<8x5xf32>
    %172 = arith.subf %168, %171 : vector<8x5xf32>
    %173 = math.exp %172 : vector<8x5xf32>
    %cst_67 = arith.constant dense<0.000000e+00> : vector<8xf32>
    %174 = vector.multi_reduction <add>, %173, %cst_67 [1] : vector<8x5xf32> to vector<8xf32>
    %175 = vector.shape_cast %174 : vector<8xf32> to vector<8x1xf32>
    %176 = tpu.reciprocal %175 {approx = true} : vector<8x1xf32> -> vector<8x1xf32>
    %177 = vector.broadcast %176 : vector<8x1xf32> to vector<8x5xf32>
    %178 = arith.mulf %173, %177 : vector<8x5xf32>
    %179 = vector.extract_strided_slice %167 {offsets = [0, 0], sizes = [8, 160], strides = [1, 1]} : vector<8x165xf32> to vector<8x160xf32>
    %cst_68 = arith.constant 0.000000e+00 : f32
    %180 = vector.broadcast %cst_68 : f32 to vector<8x160xf32>
    %181 = arith.cmpf ogt, %179, %180 : vector<8x160xf32>
    %cst_69 = arith.constant 0.00999999977 : f32
    %182 = vector.broadcast %cst_69 : f32 to vector<8x160xf32>
    %183 = arith.mulf %182, %179 : vector<8x160xf32>
    %184 = arith.select %181, %179, %183 : vector<8x160xi1>, vector<8x160xf32>
    %cst_70 = arith.constant 0.000000e+00 : f32
    %185 = vector.broadcast %cst_70 : f32 to vector<8x32xf32>
    %186 = vector.extract_strided_slice %178 {offsets = [0, 0], sizes = [8, 1], strides = [1, 1]} : vector<8x5xf32> to vector<8x1xf32>
    %187 = vector.extract_strided_slice %184 {offsets = [0, 0], sizes = [8, 32], strides = [1, 1]} : vector<8x160xf32> to vector<8x32xf32>
    %188 = vector.broadcast %186 : vector<8x1xf32> to vector<8x32xf32>
    %189 = arith.mulf %188, %187 : vector<8x32xf32>
    %190 = arith.addf %185, %189 : vector<8x32xf32>
    %191 = vector.extract_strided_slice %178 {offsets = [0, 1], sizes = [8, 1], strides = [1, 1]} : vector<8x5xf32> to vector<8x1xf32>
    %192 = vector.extract_strided_slice %184 {offsets = [0, 32], sizes = [8, 32], strides = [1, 1]} : vector<8x160xf32> to vector<8x32xf32>
    %193 = vector.broadcast %191 : vector<8x1xf32> to vector<8x32xf32>
    %194 = arith.mulf %193, %192 : vector<8x32xf32>
    %195 = arith.addf %190, %194 : vector<8x32xf32>
    %196 = vector.extract_strided_slice %178 {offsets = [0, 2], sizes = [8, 1], strides = [1, 1]} : vector<8x5xf32> to vector<8x1xf32>
    %197 = vector.extract_strided_slice %184 {offsets = [0, 64], sizes = [8, 32], strides = [1, 1]} : vector<8x160xf32> to vector<8x32xf32>
    %198 = vector.broadcast %196 : vector<8x1xf32> to vector<8x32xf32>
    %199 = arith.mulf %198, %197 : vector<8x32xf32>
    %200 = arith.addf %195, %199 : vector<8x32xf32>
    %201 = vector.extract_strided_slice %178 {offsets = [0, 3], sizes = [8, 1], strides = [1, 1]} : vector<8x5xf32> to vector<8x1xf32>
    %202 = vector.extract_strided_slice %184 {offsets = [0, 96], sizes = [8, 32], strides = [1, 1]} : vector<8x160xf32> to vector<8x32xf32>
    %203 = vector.broadcast %201 : vector<8x1xf32> to vector<8x32xf32>
    %204 = arith.mulf %203, %202 : vector<8x32xf32>
    %205 = arith.addf %200, %204 : vector<8x32xf32>
    %206 = vector.extract_strided_slice %178 {offsets = [0, 4], sizes = [8, 1], strides = [1, 1]} : vector<8x5xf32> to vector<8x1xf32>
    %207 = vector.extract_strided_slice %184 {offsets = [0, 128], sizes = [8, 32], strides = [1, 1]} : vector<8x160xf32> to vector<8x32xf32>
    %208 = vector.broadcast %206 : vector<8x1xf32> to vector<8x32xf32>
    %209 = arith.mulf %208, %207 : vector<8x32xf32>
    %210 = arith.addf %205, %209 : vector<8x32xf32>
    %211 = vector.extract_strided_slice %210 {offsets = [0, 0], sizes = [4, 32], strides = [1, 1]} : vector<8x32xf32> to vector<4x32xf32>
    %212 = arith.addf %211, %160 : vector<4x32xf32>
    %213 = vector.extract_strided_slice %210 {offsets = [4, 0], sizes = [4, 32], strides = [1, 1]} : vector<8x32xf32> to vector<4x32xf32>
    %c0_71 = arith.constant 0 : index
    %c0_72 = arith.constant 0 : index
    %214 = vector.load %arg10[%c0_71, %c0_72] : memref<4x32xf32, #tpu.memory_space<vmem>>, vector<4x32xf32>
    %215 = arith.negf %214 : vector<4x32xf32>
    %216 = math.exp %215 : vector<4x32xf32>
    %cst_73 = arith.constant 1.000000e+00 : f32
    %217 = vector.broadcast %cst_73 : f32 to vector<4x32xf32>
    %218 = arith.addf %217, %216 : vector<4x32xf32>
    %219 = arith.divf %217, %218 : vector<4x32xf32>
    %220 = arith.addf %213, %219 : vector<4x32xf32>
    %221 = arith.subf %212, %220 : vector<4x32xf32>
    %222 = arith.truncf %221 : vector<4x32xf32> to vector<4x32xbf16>
    %c0_74 = arith.constant 0 : index
    %c0_75 = arith.constant 0 : index
    %223 = vector.load %arg13[%c0_74, %c0_75] : memref<32x512xbf16, #tpu.memory_space<vmem>>, vector<32x512xbf16>
    %cst_76 = arith.constant dense<0.000000e+00> : vector<4x512xf32>
    %224 = tpu.matmul %222, %223, %cst_76 {dimension_numbers = #tpu.dot_dimension_numbers<[1], [0], [0], [1], [0, 0, 1, 1], [], []>} : vector<4x32xbf16>, vector<32x512xbf16>, vector<4x512xf32> -> vector<4x512xf32>
    %c0_77 = arith.constant 0 : index
    %c0_78 = arith.constant 0 : index
    %225 = vector.load %arg14[%c0_77, %c0_78] : memref<1x512xf32, #tpu.memory_space<vmem>>, vector<1x512xf32>
    %226 = vector.broadcast %225 : vector<1x512xf32> to vector<4x512xf32>
    %227 = arith.addf %224, %226 : vector<4x512xf32>
    %cst_79 = arith.constant 0.000000e+00 : f32
    %228 = vector.broadcast %cst_79 : f32 to vector<4x512xf32>
    %229 = arith.maximumf %227, %228 : vector<4x512xf32>
    %230 = arith.truncf %229 : vector<4x512xf32> to vector<4x512xbf16>
    %c0_80 = arith.constant 0 : index
    %c0_81 = arith.constant 0 : index
    %231 = vector.load %arg15[%c0_80, %c0_81] : memref<512x1xbf16, #tpu.memory_space<vmem>>, vector<512x1xbf16>
    %cst_82 = arith.constant dense<0.000000e+00> : vector<4x1xf32>
    %232 = tpu.matmul %230, %231, %cst_82 {dimension_numbers = #tpu.dot_dimension_numbers<[1], [0], [0], [1], [0, 0, 1, 1], [], []>} : vector<4x512xbf16>, vector<512x1xbf16>, vector<4x1xf32> -> vector<4x1xf32>
    %c0_83 = arith.constant 0 : index
    %c0_84 = arith.constant 0 : index
    %233 = vector.load %arg16[%c0_83, %c0_84] : memref<1x1xf32, #tpu.memory_space<vmem>>, vector<1x1xf32>
    %234 = vector.broadcast %233 : vector<1x1xf32> to vector<4x1xf32>
    %235 = arith.addf %232, %234 : vector<4x1xf32>
    %236 = arith.negf %235 : vector<4x1xf32>
    %237 = math.exp %236 : vector<4x1xf32>
    %cst_85 = arith.constant 1.000000e+00 : f32
    %238 = vector.broadcast %cst_85 : f32 to vector<4x1xf32>
    %239 = arith.addf %238, %237 : vector<4x1xf32>
    %240 = arith.divf %238, %239 : vector<4x1xf32>
    %241 = vector.shape_cast %240 : vector<4x1xf32> to vector<4x1xf32>
    %242 = vector.broadcast %241 : vector<4x1xf32> to vector<4x32xf32>
    %243 = tpu.concatenate %212, %242 in 1 : vector<4x32xf32>, vector<4x32xf32> -> vector<4x64xf32>
    %c0_86 = arith.constant 0 : index
    %c0_87 = arith.constant 0 : index
    %244 = vector.load %arg17[%c0_86, %c0_87] : memref<4x64xf32, #tpu.memory_space<vmem>>, vector<4x64xf32>
    tpu.vector_store %arg17[%c0_86, %c0_87], %243 {strides = array<i32>} : memref<4x64xf32, #tpu.memory_space<vmem>>, vector<4x64xf32>,
    return
  }
  func.func @transform_0(%arg0: i32) -> (i32, i32) {
    %c0_i32 = arith.constant 0 : i32
    %c0_i32_0 = arith.constant 0 : i32
    %c0_i32_1 = arith.constant 0 : i32
    return %c0_i32, %c0_i32_0 : i32, i32
  }
  func.func @transform_1(%arg0: i32) -> (i32, i32) {
    %c0_i32 = arith.constant 0 : i32
    %c0_i32_0 = arith.constant 0 : i32
    %c0_i32_1 = arith.constant 0 : i32
    return %c0_i32, %c0_i32_0 : i32, i32
  }
  func.func @transform_2(%arg0: i32) -> (i32, i32) {
    %c0_i32 = arith.constant 0 : i32
    %c0_i32_0 = arith.constant 0 : i32
    %c0_i32_1 = arith.constant 0 : i32
    return %c0_i32, %c0_i32_0 : i32, i32
  }
  func.func @transform_3(%arg0: i32) -> (i32, i32) {
    %c0_i32 = arith.constant 0 : i32
    %c0_i32_0 = arith.constant 0 : i32
    %c0_i32_1 = arith.constant 0 : i32
    return %c0_i32, %c0_i32_0 : i32, i32
  }
  func.func @transform_4(%arg0: i32) -> (i32, i32, i32) {
    %c0_i32 = arith.constant 0 : i32
    %c0_i32_0 = arith.constant 0 : i32
    %c0_i32_1 = arith.constant 0 : i32
    %c0_i32_2 = arith.constant 0 : i32
    return %c0_i32, %c0_i32_0, %c0_i32_1 : i32, i32, i32
  }
  func.func @transform_5(%arg0: i32) -> (i32, i32) {
    %c0_i32 = arith.constant 0 : i32
    %c0_i32_0 = arith.constant 0 : i32
    %c0_i32_1 = arith.constant 0 : i32
    return %c0_i32, %c0_i32_0 : i32, i32
  }
  func.func @transform_6(%arg0: i32) -> (i32, i32) {
    %c0_i32 = arith.constant 0 : i32
    %c0_i32_0 = arith.constant 0 : i32
    %c0_i32_1 = arith.constant 0 : i32
    return %c0_i32, %c0_i32_0 : i32, i32
  }
  func.func @transform_7(%arg0: i32) -> (i32, i32) {
    %c0_i32 = arith.constant 0 : i32
    %c0_i32_0 = arith.constant 0 : i32
    %c0_i32_1 = arith.constant 0 : i32
    return %c0_i32, %c0_i32_0 : i32, i32
  }
  func.func @transform_8(%arg0: i32) -> (i32, i32) {
    %c0_i32 = arith.constant 0 : i32
    %c0_i32_0 = arith.constant 0 : i32
    %c0_i32_1 = arith.constant 0 : i32
    return %c0_i32, %c0_i32_0 : i32, i32
  }
  func.func @transform_9(%arg0: i32) -> (i32, i32) {
    %c0_i32 = arith.constant 0 : i32
    %c0_i32_0 = arith.constant 0 : i32
    %c0_i32_1 = arith.constant 0 : i32
    return %c0_i32, %c0_i32_0 : i32, i32
  }
  func.func @transform_10(%arg0: i32) -> (i32, i32) {
    %c0_i32 = arith.constant 0 : i32
    %c0_i32_0 = arith.constant 0 : i32
    %c0_i32_1 = arith.constant 0 : i32
    return %c0_i32, %c0_i32_0 : i32, i32
  }
  func.func @transform_11(%arg0: i32) -> (i32, i32) {
    %c0_i32 = arith.constant 0 : i32
    %c0_i32_0 = arith.constant 0 : i32
    %c0_i32_1 = arith.constant 0 : i32
    return %c0_i32, %c0_i32_0 : i32, i32
  }
  func.func @transform_12(%arg0: i32) -> (i32, i32) {
    %c0_i32 = arith.constant 0 : i32
    %c0_i32_0 = arith.constant 0 : i32
    %c0_i32_1 = arith.constant 0 : i32
    return %c0_i32, %c0_i32_0 : i32, i32
  }
  func.func @transform_13(%arg0: i32) -> (i32, i32) {
    %c0_i32 = arith.constant 0 : i32
    %c0_i32_0 = arith.constant 0 : i32
    %c0_i32_1 = arith.constant 0 : i32
    return %c0_i32, %c0_i32_0 : i32, i32
  }
  func.func @transform_14(%arg0: i32) -> (i32, i32) {
    %c0_i32 = arith.constant 0 : i32
    %c0_i32_0 = arith.constant 0 : i32
    %c0_i32_1 = arith.constant 0 : i32
    return %c0_i32, %c0_i32_0 : i32, i32
  }
  func.func @transform_15(%arg0: i32) -> (i32, i32) {
    %c0_i32 = arith.constant 0 : i32
    %c0_i32_0 = arith.constant 0 : i32
    %c0_i32_1 = arith.constant 0 : i32
    return %c0_i32, %c0_i32_0 : i32, i32
  }
  func.func @transform_16(%arg0: i32) -> (i32, i32) {
    %c0_i32 = arith.constant 0 : i32
    %c0_i32_0 = arith.constant 0 : i32
    %c0_i32_1 = arith.constant 0 : i32
    return %c0_i32, %c0_i32_0 : i32, i32
  }
}

</mosaic_0001>

<llo_original>
// kernel: lamdanet_forward.1
$region0: #{lamdanet_forward.1}
  #allocation0 [shape = 'u32[]', space=smem, size = 0x4, offset = 0x4, fixed_abs, tag = 'smem constant byte address 0x4 - core index']
  #allocation1 [shape = 'u32[72,128]{1,0:T(1,128)}', space=vmem, size = 0x9000, scoped, tag = 'internal scratch']
  #allocation2 [shape = 'f32[1,1]{1,0:T(1,128)S(1)}', space=vmem, size = 0x200, scoped, tag = 'scoped memory for lamdanet_forward.1']
  %s0 = inlined_call_operand.vmem [shape: f32[48,384], index: 0, kind: input, shape index: {}]
  %s1 = inlined_call_operand.vmem [shape: f32[8,384], index: 1, kind: input, shape index: {}]
  %s2 = inlined_call_operand.vmem [shape: bf16[384,128], index: 2, kind: input, shape index: {}]
  %s3 = inlined_call_operand.vmem [shape: bf16[128,8], index: 3, kind: input, shape index: {}]
  %s4 = inlined_call_operand.vmem [shape: f32[4,48,48], index: 4, kind: input, shape index: {}]
  %s5 = inlined_call_operand.vmem [shape: bf16[384,165], index: 5, kind: input, shape index: {}]
  %s6 = inlined_call_operand.vmem [shape: f32[1,165], index: 6, kind: input, shape index: {}]
  %s7 = inlined_call_operand.vmem [shape: f32[4,50], index: 7, kind: input, shape index: {}]
  %s8 = inlined_call_operand.vmem [shape: f32[2,32], index: 8, kind: input, shape index: {}]
  %s9 = inlined_call_operand.vmem [shape: f32[4,32], index: 9, kind: input, shape index: {}]
  %s10 = inlined_call_operand.vmem [shape: bf16[96,32], index: 10, kind: input, shape index: {}]
  %s11 = inlined_call_operand.vmem [shape: f32[1,32], index: 11, kind: input, shape index: {}]
  %s12 = inlined_call_operand.vmem [shape: bf16[32,512], index: 12, kind: input, shape index: {}]
  %s13 = inlined_call_operand.vmem [shape: f32[1,512], index: 13, kind: input, shape index: {}]
  %s14 = inlined_call_operand.vmem [shape: bf16[512,1], index: 14, kind: input, shape index: {}]
  %s15 = inlined_call_operand.<no memory space> [shape: f32[1,1], index: 15, kind: input, shape index: {}]
  %s16 = inlined_call_operand.vmem [shape: f32[4,64], index: 16, kind: output, shape index: {}]
  %s17 = sld [smem:[#allocation0]]
  $region74: #{lamdanet_forward.1} parent=0
    _
  %s19 = ssub.s32 1, %s17
  %s20 = scalar_select 0, %s19, %s17
  %v21 = vstv %s15
  %22 = vst [vmem:[#allocation2] sm:$0x1] %v21
  // Predicated region
  $region2: #{lamdanet_forward.1} parent=0 // pred_check
    _
  $region3: #{lamdanet_forward.1} parent=0 // pred_check_branch
    %24 = sbr.rel (0) target = $region5
  $region4: #{lamdanet_forward.1} parent=0 // pred_region
    _
  $region5: #{lamdanet_forward.1} parent=0 // pred_fallthru
    _
  // Predicated region
  $region6: #{lamdanet_forward.1} parent=0 // pred_check
    _
  $region7: #{lamdanet_forward.1} parent=0 // pred_check_branch
    %26 = sbr.rel (0) target = $region9
  $region8: #{lamdanet_forward.1} parent=0 // pred_region
    _
  $region9: #{lamdanet_forward.1} parent=0 // pred_fallthru
    _
  // Predicated region
  $region10: #{lamdanet_forward.1} parent=0 // pred_check
    _
  $region11: #{lamdanet_forward.1} parent=0 // pred_check_branch
    %28 = sbr.rel (0) target = $region13
  $region12: #{lamdanet_forward.1} parent=0 // pred_region
    _
  $region13: #{lamdanet_forward.1} parent=0 // pred_fallthru
    _
  // Predicated region
  $region14: #{lamdanet_forward.1} parent=0 // pred_check
    _
  $region15: #{lamdanet_forward.1} parent=0 // pred_check_branch
    %30 = sbr.rel (0) target = $region17
  $region16: #{lamdanet_forward.1} parent=0 // pred_region
    _
  $region17: #{lamdanet_forward.1} parent=0 // pred_fallthru
    _
  // Predicated region
  $region18: #{lamdanet_forward.1} parent=0 // pred_check
    _
  $region19: #{lamdanet_forward.1} parent=0 // pred_check_branch
    %32 = sbr.rel (0) target = $region21
  $region20: #{lamdanet_forward.1} parent=0 // pred_region
    _
  $region21: #{lamdanet_forward.1} parent=0 // pred_fallthru
    _
  // Predicated region
  $region22: #{lamdanet_forward.1} parent=0 // pred_check
    _
  $region23: #{lamdanet_forward.1} parent=0 // pred_check_branch
    %34 = sbr.rel (0) target = $region25
  $region24: #{lamdanet_forward.1} parent=0 // pred_region
    _
  $region25: #{lamdanet_forward.1} parent=0 // pred_fallthru
    _
  // Predicated region
  $region26: #{lamdanet_forward.1} parent=0 // pred_check
    _
  $region27: #{lamdanet_forward.1} parent=0 // pred_check_branch
    %36 = sbr.rel (0) target = $region29
  $region28: #{lamdanet_forward.1} parent=0 // pred_region
    _
  $region29: #{lamdanet_forward.1} parent=0 // pred_fallthru
    _
  // Predicated region
  $region30: #{lamdanet_forward.1} parent=0 // pred_check
    _
  $region31: #{lamdanet_forward.1} parent=0 // pred_check_branch
    %38 = sbr.rel (0) target = $region33
  $region32: #{lamdanet_forward.1} parent=0 // pred_region
    _
  $region33: #{lamdanet_forward.1} parent=0 // pred_fallthru
    _
  // Predicated region
  $region34: #{lamdanet_forward.1} parent=0 // pred_check
    _
  $region35: #{lamdanet_forward.1} parent=0 // pred_check_branch
    %40 = sbr.rel (0) target = $region37
  $region36: #{lamdanet_forward.1} parent=0 // pred_region
    _
  $region37: #{lamdanet_forward.1} parent=0 // pred_fallthru
    _
  // Predicated region
  $region38: #{lamdanet_forward.1} parent=0 // pred_check
    _
  $region39: #{lamdanet_forward.1} parent=0 // pred_check_branch
    %42 = sbr.rel (0) target = $region41
  $region40: #{lamdanet_forward.1} parent=0 // pred_region
    _
  $region41: #{lamdanet_forward.1} parent=0 // pred_fallthru
    _
  // Predicated region
  $region42: #{lamdanet_forward.1} parent=0 // pred_check
    _
  $region43: #{lamdanet_forward.1} parent=0 // pred_check_branch
    %44 = sbr.rel (0) target = $region45
  $region44: #{lamdanet_forward.1} parent=0 // pred_region
    _
  $region45: #{lamdanet_forward.1} parent=0 // pred_fallthru
    _
  // Predicated region
  $region46: #{lamdanet_forward.1} parent=0 // pred_check
    _
  $region47: #{lamdanet_forward.1} parent=0 // pred_check_branch
    %46 = sbr.rel (0) target = $region49
  $region48: #{lamdanet_forward.1} parent=0 // pred_region
    _
  $region49: #{lamdanet_forward.1} parent=0 // pred_fallthru
    _
  // Predicated region
  $region50: #{lamdanet_forward.1} parent=0 // pred_check
    _
  $region51: #{lamdanet_forward.1} parent=0 // pred_check_branch
    %48 = sbr.rel (0) target = $region53
  $region52: #{lamdanet_forward.1} parent=0 // pred_region
    _
  $region53: #{lamdanet_forward.1} parent=0 // pred_fallthru
    _
  // Predicated region
  $region54: #{lamdanet_forward.1} parent=0 // pred_check
    _
  $region55: #{lamdanet_forward.1} parent=0 // pred_check_branch
    %50 = sbr.rel (0) target = $region57
  $region56: #{lamdanet_forward.1} parent=0 // pred_region
    _
  $region57: #{lamdanet_forward.1} parent=0 // pred_fallthru
    _
  // Predicated region
  $region58: #{lamdanet_forward.1} parent=0 // pred_check
    _
  $region59: #{lamdanet_forward.1} parent=0 // pred_check_branch
    %52 = sbr.rel (0) target = $region61
  $region60: #{lamdanet_forward.1} parent=0 // pred_region
    _
  $region61: #{lamdanet_forward.1} parent=0 // pred_fallthru
    _
  // Predicated region
  $region62: #{lamdanet_forward.1} parent=0 // pred_check
    _
  $region63: #{lamdanet_forward.1} parent=0 // pred_check_branch
    %54 = sbr.rel (0) target = $region65
  $region64: #{lamdanet_forward.1} parent=0 // pred_region
    _
  $region65: #{lamdanet_forward.1} parent=0 // pred_fallthru
    _
  %v56 = vld [vmem:[%s0] sm:$0xff]
  %v57 = vld [vmem:[%s0 + $0x8] sm:$0xff]
  %v58 = vld [vmem:[%s0 + $0x10] sm:$0xff]
  %v59 = vld [vmem:[%s0 + $0x18] sm:$0xff]
  %v60 = vld [vmem:[%s0 + $0x20] sm:$0xff]
  %v61 = vld [vmem:[%s0 + $0x28] sm:$0xff]
  %v62 = vld [vmem:[%s0 + $0x30] sm:$0xff]
  %v63 = vld [vmem:[%s0 + $0x38] sm:$0xff]
  %v64 = vld [vmem:[%s0 + $0x40] sm:$0xff]
  %v65 = vld [vmem:[%s0 + $0x48] sm:$0xff]
  %v66 = vld [vmem:[%s0 + $0x50] sm:$0xff]
  %v67 = vld [vmem:[%s0 + $0x58] sm:$0xff]
  %v68 = vld [vmem:[%s0 + $0x60] sm:$0xff]
  %v69 = vld [vmem:[%s0 + $0x68] sm:$0xff]
  %v70 = vld [vmem:[%s0 + $0x70] sm:$0xff]
  %v71 = vld [vmem:[%s0 + $0x78] sm:$0xff]
  %v72 = vld [vmem:[%s0 + $0x80] sm:$0xff]
  %v73 = vld [vmem:[%s0 + $0x88] sm:$0xff]
  %v74 = vpack.c.bf16 %v59, %v56
  %v75 = vpack.c.bf16 %v60, %v57
  %v76 = vpack.c.bf16 %v61, %v58
  %v77 = vpack.c.bf16 %v65, %v62
  %v78 = vpack.c.bf16 %v66, %v63
  %v79 = vpack.c.bf16 %v67, %v64
  %v80 = vpack.c.bf16 %v71, %v68
  %v81 = vpack.c.bf16 %v72, %v69
  %v82 = vpack.c.bf16 %v73, %v70
  %v83 = vld [vmem:[%s2] sm:$0xf]
  %v84 = vld [vmem:[%s2 + $0x4] sm:$0xf]
  %v85 = vld [vmem:[%s2 + $0x8] sm:$0xf]
  %v86 = vld [vmem:[%s2 + $0xc] sm:$0xf]
  %v87 = vld [vmem:[%s2 + $0x10] sm:$0xf]
  %v88 = vld [vmem:[%s2 + $0x14] sm:$0xf]
  %v89 = vld [vmem:[%s2 + $0x18] sm:$0xf]
  %v90 = vld [vmem:[%s2 + $0x1c] sm:$0xf]
  %v91 = vld [vmem:[%s2 + $0x20] sm:$0xf]
  %v92 = vld [vmem:[%s2 + $0x24] sm:$0xf]
  %v93 = vld [vmem:[%s2 + $0x28] sm:$0xf]
  %v94 = vld [vmem:[%s2 + $0x2c] sm:$0xf]
  %v95 = vld [vmem:[%s2 + $0x30] sm:$0xf]
  %v96 = vld [vmem:[%s2 + $0x34] sm:$0xf]
  %v97 = vld [vmem:[%s2 + $0x38] sm:$0xf]
  %v98 = vld [vmem:[%s2 + $0x3c] sm:$0xf]
  %v99 = vld [vmem:[%s2 + $0x40] sm:$0xf]
  %v100 = vld [vmem:[%s2 + $0x44] sm:$0xf]
  %v101 = vld [vmem:[%s2 + $0x48] sm:$0xf]
  %v102 = vld [vmem:[%s2 + $0x4c] sm:$0xf]
  %v103 = vld [vmem:[%s2 + $0x50] sm:$0xf]
  %v104 = vld [vmem:[%s2 + $0x54] sm:$0xf]
  %v105 = vld [vmem:[%s2 + $0x58] sm:$0xf]
  %v106 = vld [vmem:[%s2 + $0x5c] sm:$0xf]
  %v107 = vld [vmem:[%s2 + $0x60] sm:$0xf]
  %v108 = vld [vmem:[%s2 + $0x64] sm:$0xf]
  %v109 = vld [vmem:[%s2 + $0x68] sm:$0xf]
  %v110 = vld [vmem:[%s2 + $0x6c] sm:$0xf]
  %v111 = vld [vmem:[%s2 + $0x70] sm:$0xf]
  %v112 = vld [vmem:[%s2 + $0x74] sm:$0xf]
  %v113 = vld [vmem:[%s2 + $0x78] sm:$0xf]
  %v114 = vld [vmem:[%s2 + $0x7c] sm:$0xf]
  %v115 = vld [vmem:[%s2 + $0x80] sm:$0xf]
  %v116 = vld [vmem:[%s2 + $0x84] sm:$0xf]
  %v117 = vld [vmem:[%s2 + $0x88] sm:$0xf]
  %v118 = vld [vmem:[%s2 + $0x8c] sm:$0xf]
  %v119 = vld [vmem:[%s2 + $0x90] sm:$0xf]
  %v120 = vld [vmem:[%s2 + $0x94] sm:$0xf]
  %v121 = vld [vmem:[%s2 + $0x98] sm:$0xf]
  %v122 = vld [vmem:[%s2 + $0x9c] sm:$0xf]
  %v123 = vld [vmem:[%s2 + $0xa0] sm:$0xf]
  %v124 = vld [vmem:[%s2 + $0xa4] sm:$0xf]
  %v125 = vld [vmem:[%s2 + $0xa8] sm:$0xf]
  %v126 = vld [vmem:[%s2 + $0xac] sm:$0xf]
  %v127 = vld [vmem:[%s2 + $0xb0] sm:$0xf]
  %v128 = vld [vmem:[%s2 + $0xb4] sm:$0xf]
  %v129 = vld [vmem:[%s2 + $0xb8] sm:$0xf]
  %v130 = vld [vmem:[%s2 + $0xbc] sm:$0xf]
  %v179 = vunpack.c.l.b16 %v83
  %v180 = vunpack.c.l.b16 %v84
  %v181 = vunpack.c.l.b16 %v85
  %v182 = vunpack.c.l.b16 %v86
  %v183 = vunpack.c.l.b16 %v87
  %v184 = vunpack.c.l.b16 %v88
  %v185 = vunpack.c.l.b16 %v89
  %v186 = vunpack.c.l.b16 %v90
  %v187 = vunpack.c.l.b16 %v91
  %v188 = vunpack.c.l.b16 %v92
  %v189 = vunpack.c.l.b16 %v93
  %v190 = vunpack.c.l.b16 %v94
  %v191 = vunpack.c.l.b16 %v95
  %v192 = vunpack.c.l.b16 %v96
  %v193 = vunpack.c.l.b16 %v97
  %v194 = vunpack.c.l.b16 %v98
  %v195 = vunpack.c.l.b16 %v99
  %v196 = vunpack.c.l.b16 %v100
  %v197 = vunpack.c.l.b16 %v101
  %v198 = vunpack.c.l.b16 %v102
  %v199 = vunpack.c.l.b16 %v103
  %v200 = vunpack.c.l.b16 %v104
  %v201 = vunpack.c.l.b16 %v105
  %v202 = vunpack.c.l.b16 %v106
  %v203 = vunpack.c.l.b16 %v107
  %v204 = vunpack.c.l.b16 %v108
  %v205 = vunpack.c.l.b16 %v109
  %v206 = vunpack.c.l.b16 %v110
  %v207 = vunpack.c.l.b16 %v111
  %v208 = vunpack.c.l.b16 %v112
  %v209 = vunpack.c.l.b16 %v113
  %v210 = vunpack.c.l.b16 %v114
  %v211 = vunpack.c.l.b16 %v115
  %v212 = vunpack.c.l.b16 %v116
  %v213 = vunpack.c.l.b16 %v117
  %v214 = vunpack.c.l.b16 %v118
  %v215 = vunpack.c.l.b16 %v119
  %v216 = vunpack.c.l.b16 %v120
  %v217 = vunpack.c.l.b16 %v121
  %v218 = vunpack.c.l.b16 %v122
  %v219 = vunpack.c.l.b16 %v123
  %v220 = vunpack.c.l.b16 %v124
  %v221 = vunpack.c.l.b16 %v125
  %v222 = vunpack.c.l.b16 %v126
  %v223 = vunpack.c.l.b16 %v127
  %v224 = vunpack.c.l.b16 %v128
  %v225 = vunpack.c.l.b16 %v129
  %v226 = vunpack.c.l.b16 %v130
  %v227 = vpack.c.b16 %v180, %v179
  %v228 = vpack.c.b16 %v182, %v181
  %v229 = vpack.c.b16 %v184, %v183
  %v230 = vpack.c.b16 %v186, %v185
  %v231 = vpack.c.b16 %v188, %v187
  %v232 = vpack.c.b16 %v190, %v189
  %v233 = vpack.c.b16 %v192, %v191
  %v234 = vpack.c.b16 %v194, %v193
  %v235 = vpack.c.b16 %v196, %v195
  %v236 = vpack.c.b16 %v198, %v197
  %v237 = vpack.c.b16 %v200, %v199
  %v238 = vpack.c.b16 %v202, %v201
  %v239 = vpack.c.b16 %v204, %v203
  %v240 = vpack.c.b16 %v206, %v205
  %v241 = vpack.c.b16 %v208, %v207
  %v242 = vpack.c.b16 %v210, %v209
  %v243 = vpack.c.b16 %v212, %v211
  %v244 = vpack.c.b16 %v214, %v213
  %v245 = vpack.c.b16 %v216, %v215
  %v246 = vpack.c.b16 %v218, %v217
  %v247 = vpack.c.b16 %v220, %v219
  %v248 = vpack.c.b16 %v222, %v221
  %v249 = vpack.c.b16 %v224, %v223
  %v250 = vpack.c.b16 %v226, %v225
  %275 = vmatpush.bf16.msra.mxu0 %v234
  %276 = vmatpush.bf16.msra.mxu0 %v233
  %277 = vmatpush.bf16.msra.mxu0 %v232
  %278 = vmatpush.bf16.msra.mxu0 %v231
  %279 = vmatpush.bf16.msra.mxu0 %v230
  %280 = vmatpush.bf16.msra.mxu0 %v229
  %281 = vmatpush.bf16.msra.mxu0 %v228
  %282 = vmatpush.bf16.msra.mxu0 %v227
  %283 = vmatmul.bf16.gmra.mxu0 %v74
  %v284 = vpop.f32.mrf.mxu0
  %v285 = vadd.f32 0.0, %v284
  %v286 = vpop.f32.mrf.mxu0
  %v287 = vadd.f32 0.0, %v286
  %288 = vmatmul.bf16.gmra.mxu0 %v77
  %v289 = vpop.f32.mrf.mxu0
  %v290 = vadd.f32 0.0, %v289
  %v291 = vpop.f32.mrf.mxu0
  %v292 = vadd.f32 0.0, %v291
  %293 = vmatmul.bf16.gmra.mxu0 %v80
  %v294 = vpop.f32.mrf.mxu0
  %v295 = vadd.f32 0.0, %v294
  %v296 = vpop.f32.mrf.mxu0
  %v297 = vadd.f32 0.0, %v296
  %298 = vdwg.mxu0
  %299 = vmatpush.bf16.msra.mxu0 %v242
  %300 = vmatpush.bf16.msra.mxu0 %v241
  %301 = vmatpush.bf16.msra.mxu0 %v240
  %302 = vmatpush.bf16.msra.mxu0 %v239
  %303 = vmatpush.bf16.msra.mxu0 %v238
  %304 = vmatpush.bf16.msra.mxu0 %v237
  %305 = vmatpush.bf16.msra.mxu0 %v236
  %306 = vmatpush.bf16.msra.mxu0 %v235
  %307 = vmatmul.bf16.gmra.mxu0 %v75
  %v308 = vpop.f32.mrf.mxu0
  %v309 = vadd.f32 %v285, %v308
  %v310 = vpop.f32.mrf.mxu0
  %v311 = vadd.f32 %v287, %v310
  %312 = vmatmul.bf16.gmra.mxu0 %v78
  %v313 = vpop.f32.mrf.mxu0
  %v314 = vadd.f32 %v290, %v313
  %v315 = vpop.f32.mrf.mxu0
  %v316 = vadd.f32 %v292, %v315
  %317 = vmatmul.bf16.gmra.mxu0 %v81
  %v318 = vpop.f32.mrf.mxu0
  %v319 = vadd.f32 %v295, %v318
  %v320 = vpop.f32.mrf.mxu0
  %v321 = vadd.f32 %v297, %v320
  %322 = vdwg.mxu0
  %323 = vmatpush.bf16.msra.mxu0 %v250
  %324 = vmatpush.bf16.msra.mxu0 %v249
  %325 = vmatpush.bf16.msra.mxu0 %v248
  %326 = vmatpush.bf16.msra.mxu0 %v247
  %327 = vmatpush.bf16.msra.mxu0 %v246
  %328 = vmatpush.bf16.msra.mxu0 %v245
  %329 = vmatpush.bf16.msra.mxu0 %v244
  %330 = vmatpush.bf16.msra.mxu0 %v243
  %331 = vmatmul.bf16.gmra.mxu0 %v76
  %v332 = vpop.f32.mrf.mxu0
  %v333 = vadd.f32 %v309, %v332
  %v334 = vpop.f32.mrf.mxu0
  %v335 = vadd.f32 %v311, %v334
  %336 = vmatmul.bf16.gmra.mxu0 %v79
  %v337 = vpop.f32.mrf.mxu0
  %v338 = vadd.f32 %v314, %v337
  %v339 = vpop.f32.mrf.mxu0
  %v340 = vadd.f32 %v316, %v339
  %341 = vmatmul.bf16.gmra.mxu0 %v82
  %v342 = vpop.f32.mrf.mxu0
  %v343 = vadd.f32 %v319, %v342
  %v344 = vpop.f32.mrf.mxu0
  %v345 = vadd.f32 %v321, %v344
  %346 = vdwg.mxu0
  %v347 = vpack.c.bf16 %v335, %v333
  %v348 = vpack.c.bf16 %v340, %v338
  %v349 = vpack.c.bf16 %v345, %v343
  %v350 = vld [vmem:[%s3] sm:$0xf]
  %v351 = vld [vmem:[%s3 + $0x4] sm:$0xf]
  %v352 = vld [vmem:[%s3 + $0x8] sm:$0xf]
  %v353 = vld [vmem:[%s3 + $0xc] sm:$0xf]
  %v354 = vld [vmem:[%s3 + $0x10] sm:$0xf]
  %v355 = vld [vmem:[%s3 + $0x14] sm:$0xf]
  %v356 = vld [vmem:[%s3 + $0x18] sm:$0xf]
  %v357 = vld [vmem:[%s3 + $0x1c] sm:$0xf]
  %v358 = vld [vmem:[%s3 + $0x20] sm:$0xf]
  %v359 = vld [vmem:[%s3 + $0x24] sm:$0xf]
  %v360 = vld [vmem:[%s3 + $0x28] sm:$0xf]
  %v361 = vld [vmem:[%s3 + $0x2c] sm:$0xf]
  %v362 = vld [vmem:[%s3 + $0x30] sm:$0xf]
  %v363 = vld [vmem:[%s3 + $0x34] sm:$0xf]
  %v364 = vld [vmem:[%s3 + $0x38] sm:$0xf]
  %v365 = vld [vmem:[%s3 + $0x3c] sm:$0xf]
  %v382 = vunpack.c.l.b16 %v350
  %v383 = vunpack.c.l.b16 %v351
  %v384 = vunpack.c.l.b16 %v352
  %v385 = vunpack.c.l.b16 %v353
  %v386 = vunpack.c.l.b16 %v354
  %v387 = vunpack.c.l.b16 %v355
  %v388 = vunpack.c.l.b16 %v356
  %v389 = vunpack.c.l.b16 %v357
  %v390 = vunpack.c.l.b16 %v358
  %v391 = vunpack.c.l.b16 %v359
  %v392 = vunpack.c.l.b16 %v360
  %v393 = vunpack.c.l.b16 %v361
  %v394 = vunpack.c.l.b16 %v362
  %v395 = vunpack.c.l.b16 %v363
  %v396 = vunpack.c.l.b16 %v364
  %v397 = vunpack.c.l.b16 %v365
  %v398 = vpack.c.b16 %v383, %v382
  %v399 = vpack.c.b16 %v385, %v384
  %v400 = vpack.c.b16 %v387, %v386
  %v401 = vpack.c.b16 %v389, %v388
  %v402 = vpack.c.b16 %v391, %v390
  %v403 = vpack.c.b16 %v393, %v392
  %v404 = vpack.c.b16 %v395, %v394
  %v405 = vpack.c.b16 %v397, %v396
  %414 = vmatpush.bf16.msra.mxu0 %v405
  %415 = vmatpush.bf16.msra.mxu0 %v404
  %416 = vmatpush.bf16.msra.mxu0 %v403
  %417 = vmatpush.bf16.msra.mxu0 %v402
  %418 = vmatpush.bf16.msra.mxu0 %v401
  %419 = vmatpush.bf16.msra.mxu0 %v400
  %420 = vmatpush.bf16.msra.mxu0 %v399
  %421 = vmatpush.bf16.msra.mxu0 %v398
  %422 = vmatmul.bf16.gmra.mxu0 %v347
  %v423 = vpop.f32.mrf.mxu0
  %v424 = vadd.f32 0.0, %v423
  %v425 = vpop.f32.mrf.mxu0
  %v426 = vadd.f32 0.0, %v425
  %427 = vmatmul.bf16.gmra.mxu0 %v348
  %v428 = vpop.f32.mrf.mxu0
  %v429 = vadd.f32 0.0, %v428
  %v430 = vpop.f32.mrf.mxu0
  %v431 = vadd.f32 0.0, %v430
  %432 = vmatmul.bf16.gmra.mxu0 %v349
  %v433 = vpop.f32.mrf.mxu0
  %v434 = vadd.f32 0.0, %v433
  %v435 = vpop.f32.mrf.mxu0
  %v436 = vadd.f32 0.0, %v435
  %437 = vdwg.mxu0
  %v438 = vld [vmem:[%s4] sm:$0xff]
  %v439 = vld [vmem:[%s4 + $0x8] sm:$0xff]
  %v440 = vld [vmem:[%s4 + $0x10] sm:$0xff]
  %v441 = vld [vmem:[%s4 + $0x18] sm:$0xff]
  %v442 = vld [vmem:[%s4 + $0x20] sm:$0xff]
  %v443 = vld [vmem:[%s4 + $0x28] sm:$0xff]
  %444 = vxpose.xlu0.b32.start [1/16] %v424, 128
  %445 = vxpose.xlu0.b32.cont [2/16] %v426, 128
  %446 = vxpose.xlu0.b32.cont [3/16] %v429, 128
  %447 = vxpose.xlu0.b32.cont [4/16] %v431, 128
  %448 = vxpose.xlu0.b32.cont [5/16] %v434, 128
  %449 = vxpose.xlu0.b32.cont [6/16] %v436, 128
  %450 = vxpose.xlu0.b32.cont [7/16] 0.0, 128
  %451 = vxpose.xlu0.b32.cont [8/16] 0.0, 128
  %452 = vxpose.xlu0.b32.cont [9/16] 0.0, 128
  %453 = vxpose.xlu0.b32.cont [10/16] 0.0, 128
  %454 = vxpose.xlu0.b32.cont [11/16] 0.0, 128
  %455 = vxpose.xlu0.b32.cont [12/16] 0.0, 128
  %456 = vxpose.xlu0.b32.cont [13/16] 0.0, 128
  %457 = vxpose.xlu0.b32.cont [14/16] 0.0, 128
  %458 = vxpose.xlu0.b32.cont [15/16] 0.0, 128
  %459 = vxpose.xlu0.b32.end [16/16] 0.0, 128
  %v460 = vpop.trf.xlu0
  %v461 = vpop.trf.xlu0
  %v462 = vpop.trf.xlu0
  %v463 = vpop.trf.xlu0
  %v464 = vpop.trf.xlu0
  %v465 = vpop.trf.xlu0
  %v466 = vpop.trf.xlu0
  %v467 = vpop.trf.xlu0
  %v468 = vpop.trf.xlu0
  %v469 = vpop.trf.xlu0
  %v470 = vpop.trf.xlu0
  %v471 = vpop.trf.xlu0
  %v472 = vpop.trf.xlu0
  %v473 = vpop.trf.xlu0
  %v474 = vpop.trf.xlu0
  %v475 = vpop.trf.xlu0
  %477 = vset.pattern.permute.xlu0 1
  %478 = vperm.xlu0 %477, %v424
  %v479 = vpop.permute.xlu0 %478
  %482 = vset.pattern.permute.xlu0 1
  %483 = vperm.xlu0 %482, %v426
  %v484 = vpop.permute.xlu0 %483
  %487 = vset.pattern.permute.xlu0 1
  %488 = vperm.xlu0 %487, %v429
  %v489 = vpop.permute.xlu0 %488
  %492 = vset.pattern.permute.xlu0 1
  %493 = vperm.xlu0 %492, %v431
  %v494 = vpop.permute.xlu0 %493
  %497 = vset.pattern.permute.xlu0 1
  %498 = vperm.xlu0 %497, %v434
  %v499 = vpop.permute.xlu0 %498
  %502 = vset.pattern.permute.xlu0 1
  %503 = vperm.xlu0 %502, %v436
  %v504 = vpop.permute.xlu0 %503
  %v506 = vperm.slane %v460, 0
  %v507 = vadd.f32 %v479, %v506
  %v508 = vadd.f32 %v484, %v506
  %v509 = vadd.f32 %v489, %v506
  %v510 = vadd.f32 %v494, %v506
  %v511 = vadd.f32 %v499, %v506
  %v512 = vadd.f32 %v504, %v506
  %vm513 = vcmp.gt.f32.partialorder %v438, 0.0
  %vm514 = vcmp.gt.f32.partialorder %v439, 0.0
  %vm515 = vcmp.gt.f32.partialorder %v440, 0.0
  %vm516 = vcmp.gt.f32.partialorder %v441, 0.0
  %vm517 = vcmp.gt.f32.partialorder %v442, 0.0
  %vm518 = vcmp.gt.f32.partialorder %v443, 0.0
  %v519 = vsel %vm513, %v507, -1e+30
  %v520 = vsel %vm514, %v508, -1e+30
  %v521 = vsel %vm515, %v509, -1e+30
  %v522 = vsel %vm516, %v510, -1e+30
  %v523 = vsel %vm517, %v511, -1e+30
  %v524 = vsel %vm518, %v512, -1e+30
  %vm525 = vcmask 392192
  %v526 = vsel %vm525, %v519, -inf
  %527 = vmax.xlane.f32.xlu0 %v526
  %v528 = vpop.xlane.xlu0 %527
  %v529 = vsel %vm525, %v520, -inf
  %530 = vmax.xlane.f32.xlu0 %v529
  %v531 = vpop.xlane.xlu0 %530
  %v532 = vsel %vm525, %v521, -inf
  %533 = vmax.xlane.f32.xlu0 %v532
  %v534 = vpop.xlane.xlu0 %533
  %v535 = vsel %vm525, %v522, -inf
  %536 = vmax.xlane.f32.xlu0 %v535
  %v537 = vpop.xlane.xlu0 %536
  %v538 = vsel %vm525, %v523, -inf
  %539 = vmax.xlane.f32.xlu0 %v538
  %v540 = vpop.xlane.xlu0 %539
  %v541 = vsel %vm525, %v524, -inf
  %542 = vmax.xlane.f32.xlu0 %v541
  %v543 = vpop.xlane.xlu0 %542
  %v544 = vsub.f32 %v519, %v528
  %v545 = vsub.f32 %v520, %v531
  %v546 = vsub.f32 %v521, %v534
  %v547 = vsub.f32 %v522, %v537
  %v548 = vsub.f32 %v523, %v540
  %v549 = vsub.f32 %v524, %v543
  %v550 = vmul.f32 %v544, 1.442695
  %v551 = vpow.pop %v550
  %v552 = vmul.f32 %v545, 1.442695
  %v553 = vpow.pop %v552
  %v554 = vmul.f32 %v546, 1.442695
  %v555 = vpow.pop %v554
  %v556 = vmul.f32 %v547, 1.442695
  %v557 = vpow.pop %v556
  %v558 = vmul.f32 %v548, 1.442695
  %v559 = vpow.pop %v558
  %v560 = vmul.f32 %v549, 1.442695
  %v561 = vpow.pop %v560
  %v562 = vmul.f32 %v551, %v438
  %v563 = vmul.f32 %v553, %v439
  %v564 = vmul.f32 %v555, %v440
  %v565 = vmul.f32 %v557, %v441
  %v566 = vmul.f32 %v559, %v442
  %v567 = vmul.f32 %v561, %v443
  %v568 = vsel %vm525, %v562, 0.0
  %569 = vadd.xlane.f32.xlu0 %v568
  %v570 = vpop.xlane.xlu0 %569
  %v571 = vsel %vm525, %v563, 0.0
  %572 = vadd.xlane.f32.xlu0 %v571
  %v573 = vpop.xlane.xlu0 %572
  %v574 = vsel %vm525, %v564, 0.0
  %575 = vadd.xlane.f32.xlu0 %v574
  %v576 = vpop.xlane.xlu0 %575
  %v577 = vsel %vm525, %v565, 0.0
  %578 = vadd.xlane.f32.xlu0 %v577
  %v579 = vpop.xlane.xlu0 %578
  %v580 = vsel %vm525, %v566, 0.0
  %581 = vadd.xlane.f32.xlu0 %v580
  %v582 = vpop.xlane.xlu0 %581
  %v583 = vsel %vm525, %v567, 0.0
  %584 = vadd.xlane.f32.xlu0 %v583
  %v585 = vpop.xlane.xlu0 %584
  %vm586 = vcmp.gt.f32.partialorder %v570, 0.0
  %vm587 = vcmp.gt.f32.partialorder %v573, 0.0
  %vm588 = vcmp.gt.f32.partialorder %v576, 0.0
  %vm589 = vcmp.gt.f32.partialorder %v579, 0.0
  %vm590 = vcmp.gt.f32.partialorder %v582, 0.0
  %vm591 = vcmp.gt.f32.partialorder %v585, 0.0
  %v592 = vsel %vm586, %v570, 1.0
  %v593 = vsel %vm587, %v573, 1.0
  %v594 = vsel %vm588, %v576, 1.0
  %v595 = vsel %vm589, %v579, 1.0
  %v596 = vsel %vm590, %v582, 1.0
  %v597 = vsel %vm591, %v585, 1.0
  %v598 = vrcp.pop %v592
  %v599 = vrcp.pop %v593
  %v600 = vrcp.pop %v594
  %v601 = vrcp.pop %v595
  %v602 = vrcp.pop %v596
  %v603 = vrcp.pop %v597
  %v604 = vmul.f32 %v562, %v598
  %v605 = vmul.f32 %v563, %v599
  %v606 = vmul.f32 %v564, %v600
  %v607 = vmul.f32 %v565, %v601
  %v608 = vmul.f32 %v566, %v602
  %v609 = vmul.f32 %v567, %v603
  %v611 = vsel %vm525, %v604, 0
  %v614 = vsel %vm525, %v605, 0
  %v617 = vsel %vm525, %v606, 0
  %v620 = vsel %vm525, %v607, 0
  %v623 = vsel %vm525, %v608, 0
  %v626 = vsel %vm525, %v609, 0
  %628 = vmatpush.msra.mxu0 0.0
  %629 = vmatpush.msra.mxu0 0.0
  %630 = vmatpush.msra.mxu0 0.0
  %631 = vmatpush.msra.mxu0 0.0
  %632 = vmatpush.msra.mxu0 0.0
  %633 = vmatpush.msra.mxu0 0.0
  %634 = vmatpush.msra.mxu0 0.0
  %635 = vmatpush.msra.mxu0 0.0
  %636 = vmatpush.msra.mxu0 0.0
  %637 = vmatpush.msra.mxu0 0.0
  %638 = vmatpush.msra.mxu0 %v345
  %639 = vmatpush.msra.mxu0 %v343
  %640 = vmatpush.msra.mxu0 %v340
  %641 = vmatpush.msra.mxu0 %v338
  %642 = vmatpush.msra.mxu0 %v335
  %643 = vmatpush.msra.mxu0 %v333
  %644 = vmatmul.f32.gmra.mxu0 %v611
  %v645 = vpop.f32.mrf.mxu0
  %646 = vmatmul.f32.gmra.mxu0 %v614
  %v647 = vpop.f32.mrf.mxu0
  %648 = vmatmul.f32.gmra.mxu0 %v617
  %v649 = vpop.f32.mrf.mxu0
  %v650 = vadd.f32 0.0, %v649
  %651 = vmatmul.f32.gmra.mxu0 %v620
  %v652 = vpop.f32.mrf.mxu0
  %v653 = vadd.f32 0.0, %v652
  %654 = vmatmul.f32.gmra.mxu0 %v623
  %v655 = vpop.f32.mrf.mxu0
  %v656 = vadd.f32 0.0, %v655
  %657 = vmatmul.f32.gmra.mxu0 %v626
  %v658 = vpop.f32.mrf.mxu0
  %v659 = vadd.f32 0.0, %v658
  %660 = vdwg.mxu0
  %s661 = scalar_lea.vmem %s4, 48
  %v662 = vld [vmem:[%s661] sm:$0xff]
  %v663 = vld [vmem:[%s661 + $0x8] sm:$0xff]
  %v664 = vld [vmem:[%s661 + $0x10] sm:$0xff]
  %v665 = vld [vmem:[%s661 + $0x18] sm:$0xff]
  %v666 = vld [vmem:[%s661 + $0x20] sm:$0xff]
  %v667 = vld [vmem:[%s661 + $0x28] sm:$0xff]
  %668 = vrot.lane.b32.xlu0 %v424, 126
  %v669 = vpop.permute.xlu0 %668
  %670 = vrot.lane.b32.xlu0 %v426, 126
  %v671 = vpop.permute.xlu0 %670
  %672 = vrot.lane.b32.xlu0 %v429, 126
  %v673 = vpop.permute.xlu0 %672
  %674 = vrot.lane.b32.xlu0 %v431, 126
  %v675 = vpop.permute.xlu0 %674
  %676 = vrot.lane.b32.xlu0 %v434, 126
  %v677 = vpop.permute.xlu0 %676
  %678 = vrot.lane.b32.xlu0 %v436, 126
  %v679 = vpop.permute.xlu0 %678
  %686 = vxpose.xlu0.b32.start [1/16] %v669, 128
  %687 = vxpose.xlu0.b32.cont [2/16] %v671, 128
  %688 = vxpose.xlu0.b32.cont [3/16] %v673, 128
  %689 = vxpose.xlu0.b32.cont [4/16] %v675, 128
  %690 = vxpose.xlu0.b32.cont [5/16] %v677, 128
  %691 = vxpose.xlu0.b32.cont [6/16] %v679, 128
  %692 = vxpose.xlu0.b32.cont [7/16] 0.0, 128
  %693 = vxpose.xlu0.b32.cont [8/16] 0.0, 128
  %694 = vxpose.xlu0.b32.cont [9/16] 0.0, 128
  %695 = vxpose.xlu0.b32.cont [10/16] 0.0, 128
  %696 = vxpose.xlu0.b32.cont [11/16] 0.0, 128
  %697 = vxpose.xlu0.b32.cont [12/16] 0.0, 128
  %698 = vxpose.xlu0.b32.cont [13/16] 0.0, 128
  %699 = vxpose.xlu0.b32.cont [14/16] 0.0, 128
  %700 = vxpose.xlu0.b32.cont [15/16] 0.0, 128
  %701 = vxpose.xlu0.b32.end [16/16] 0.0, 128
  %v702 = vpop.trf.xlu0
  %v703 = vpop.trf.xlu0
  %v704 = vpop.trf.xlu0
  %v705 = vpop.trf.xlu0
  %v706 = vpop.trf.xlu0
  %v707 = vpop.trf.xlu0
  %v708 = vpop.trf.xlu0
  %v709 = vpop.trf.xlu0
  %v710 = vpop.trf.xlu0
  %v711 = vpop.trf.xlu0
  %v712 = vpop.trf.xlu0
  %v713 = vpop.trf.xlu0
  %v714 = vpop.trf.xlu0
  %v715 = vpop.trf.xlu0
  %v716 = vpop.trf.xlu0
  %v717 = vpop.trf.xlu0
  %718 = vset.pattern.permute.xlu0 3
  %719 = vperm.xlu0 %718, %v424
  %v720 = vpop.permute.xlu0 %719
  %722 = vset.pattern.permute.xlu0 3
  %723 = vperm.xlu0 %722, %v426
  %v724 = vpop.permute.xlu0 %723
  %726 = vset.pattern.permute.xlu0 3
  %727 = vperm.xlu0 %726, %v429
  %v728 = vpop.permute.xlu0 %727
  %730 = vset.pattern.permute.xlu0 3
  %731 = vperm.xlu0 %730, %v431
  %v732 = vpop.permute.xlu0 %731
  %734 = vset.pattern.permute.xlu0 3
  %735 = vperm.xlu0 %734, %v434
  %v736 = vpop.permute.xlu0 %735
  %738 = vset.pattern.permute.xlu0 3
  %739 = vperm.xlu0 %738, %v436
  %v740 = vpop.permute.xlu0 %739
  %v742 = vperm.slane %v702, 0
  %v743 = vadd.f32 %v720, %v742
  %v744 = vadd.f32 %v724, %v742
  %v745 = vadd.f32 %v728, %v742
  %v746 = vadd.f32 %v732, %v742
  %v747 = vadd.f32 %v736, %v742
  %v748 = vadd.f32 %v740, %v742
  %vm749 = vcmp.gt.f32.partialorder %v662, 0.0
  %vm750 = vcmp.gt.f32.partialorder %v663, 0.0
  %vm751 = vcmp.gt.f32.partialorder %v664, 0.0
  %vm752 = vcmp.gt.f32.partialorder %v665, 0.0
  %vm753 = vcmp.gt.f32.partialorder %v666, 0.0
  %vm754 = vcmp.gt.f32.partialorder %v667, 0.0
  %v755 = vsel %vm749, %v743, -1e+30
  %v756 = vsel %vm750, %v744, -1e+30
  %v757 = vsel %vm751, %v745, -1e+30
  %v758 = vsel %vm752, %v746, -1e+30
  %v759 = vsel %vm753, %v747, -1e+30
  %v760 = vsel %vm754, %v748, -1e+30
  %v761 = vsel %vm525, %v755, -inf
  %762 = vmax.xlane.f32.xlu0 %v761
  %v763 = vpop.xlane.xlu0 %762
  %v764 = vsel %vm525, %v756, -inf
  %765 = vmax.xlane.f32.xlu0 %v764
  %v766 = vpop.xlane.xlu0 %765
  %v767 = vsel %vm525, %v757, -inf
  %768 = vmax.xlane.f32.xlu0 %v767
  %v769 = vpop.xlane.xlu0 %768
  %v770 = vsel %vm525, %v758, -inf
  %771 = vmax.xlane.f32.xlu0 %v770
  %v772 = vpop.xlane.xlu0 %771
  %v773 = vsel %vm525, %v759, -inf
  %774 = vmax.xlane.f32.xlu0 %v773
  %v775 = vpop.xlane.xlu0 %774
  %v776 = vsel %vm525, %v760, -inf
  %777 = vmax.xlane.f32.xlu0 %v776
  %v778 = vpop.xlane.xlu0 %777
  %v779 = vsub.f32 %v755, %v763
  %v780 = vsub.f32 %v756, %v766
  %v781 = vsub.f32 %v757, %v769
  %v782 = vsub.f32 %v758, %v772
  %v783 = vsub.f32 %v759, %v775
  %v784 = vsub.f32 %v760, %v778
  %v785 = vmul.f32 %v779, 1.442695
  %v786 = vpow.pop %v785
  %v787 = vmul.f32 %v780, 1.442695
  %v788 = vpow.pop %v787
  %v789 = vmul.f32 %v781, 1.442695
  %v790 = vpow.pop %v789
  %v791 = vmul.f32 %v782, 1.442695
  %v792 = vpow.pop %v791
  %v793 = vmul.f32 %v783, 1.442695
  %v794 = vpow.pop %v793
  %v795 = vmul.f32 %v784, 1.442695
  %v796 = vpow.pop %v795
  %v797 = vmul.f32 %v786, %v662
  %v798 = vmul.f32 %v788, %v663
  %v799 = vmul.f32 %v790, %v664
  %v800 = vmul.f32 %v792, %v665
  %v801 = vmul.f32 %v794, %v666
  %v802 = vmul.f32 %v796, %v667
  %v803 = vsel %vm525, %v797, 0.0
  %804 = vadd.xlane.f32.xlu0 %v803
  %v805 = vpop.xlane.xlu0 %804
  %v806 = vsel %vm525, %v798, 0.0
  %807 = vadd.xlane.f32.xlu0 %v806
  %v808 = vpop.xlane.xlu0 %807
  %v809 = vsel %vm525, %v799, 0.0
  %810 = vadd.xlane.f32.xlu0 %v809
  %v811 = vpop.xlane.xlu0 %810
  %v812 = vsel %vm525, %v800, 0.0
  %813 = vadd.xlane.f32.xlu0 %v812
  %v814 = vpop.xlane.xlu0 %813
  %v815 = vsel %vm525, %v801, 0.0
  %816 = vadd.xlane.f32.xlu0 %v815
  %v817 = vpop.xlane.xlu0 %816
  %v818 = vsel %vm525, %v802, 0.0
  %819 = vadd.xlane.f32.xlu0 %v818
  %v820 = vpop.xlane.xlu0 %819
  %vm821 = vcmp.gt.f32.partialorder %v805, 0.0
  %vm822 = vcmp.gt.f32.partialorder %v808, 0.0
  %vm823 = vcmp.gt.f32.partialorder %v811, 0.0
  %vm824 = vcmp.gt.f32.partialorder %v814, 0.0
  %vm825 = vcmp.gt.f32.partialorder %v817, 0.0
  %vm826 = vcmp.gt.f32.partialorder %v820, 0.0
  %v827 = vsel %vm821, %v805, 1.0
  %v828 = vsel %vm822, %v808, 1.0
  %v829 = vsel %vm823, %v811, 1.0
  %v830 = vsel %vm824, %v814, 1.0
  %v831 = vsel %vm825, %v817, 1.0
  %v832 = vsel %vm826, %v820, 1.0
  %v833 = vrcp.pop %v827
  %v834 = vrcp.pop %v828
  %v835 = vrcp.pop %v829
  %v836 = vrcp.pop %v830
  %v837 = vrcp.pop %v831
  %v838 = vrcp.pop %v832
  %v839 = vmul.f32 %v797, %v833
  %v840 = vmul.f32 %v798, %v834
  %v841 = vmul.f32 %v799, %v835
  %v842 = vmul.f32 %v800, %v836
  %v843 = vmul.f32 %v801, %v837
  %v844 = vmul.f32 %v802, %v838
  %851 = vrot.lane.b32.xlu0 %v333, 96
  %v852 = vpop.permute.xlu0 %851
  %853 = vrot.lane.b32.xlu0 %v335, 96
  %v854 = vpop.permute.xlu0 %853
  %855 = vrot.lane.b32.xlu0 %v338, 96
  %v856 = vpop.permute.xlu0 %855
  %857 = vrot.lane.b32.xlu0 %v340, 96
  %v858 = vpop.permute.xlu0 %857
  %859 = vrot.lane.b32.xlu0 %v343, 96
  %v860 = vpop.permute.xlu0 %859
  %861 = vrot.lane.b32.xlu0 %v345, 96
  %v862 = vpop.permute.xlu0 %861
  %v870 = vsel %vm525, %v839, 0
  %v873 = vsel %vm525, %v840, 0
  %v876 = vsel %vm525, %v841, 0
  %v879 = vsel %vm525, %v842, 0
  %v882 = vsel %vm525, %v843, 0
  %v885 = vsel %vm525, %v844, 0
  %887 = vmatpush.msra.mxu0 0.0
  %888 = vmatpush.msra.mxu0 0.0
  %889 = vmatpush.msra.mxu0 0.0
  %890 = vmatpush.msra.mxu0 0.0
  %891 = vmatpush.msra.mxu0 0.0
  %892 = vmatpush.msra.mxu0 0.0
  %893 = vmatpush.msra.mxu0 0.0
  %894 = vmatpush.msra.mxu0 0.0
  %895 = vmatpush.msra.mxu0 0.0
  %896 = vmatpush.msra.mxu0 0.0
  %897 = vmatpush.msra.mxu0 %v862
  %898 = vmatpush.msra.mxu0 %v860
  %899 = vmatpush.msra.mxu0 %v858
  %900 = vmatpush.msra.mxu0 %v856
  %901 = vmatpush.msra.mxu0 %v854
  %902 = vmatpush.msra.mxu0 %v852
  %903 = vmatmul.f32.gmra.mxu0 %v870
  %v904 = vpop.f32.mrf.mxu0
  %905 = vmatmul.f32.gmra.mxu0 %v873
  %v906 = vpop.f32.mrf.mxu0
  %907 = vmatmul.f32.gmra.mxu0 %v876
  %v908 = vpop.f32.mrf.mxu0
  %v909 = vadd.f32 0.0, %v908
  %910 = vmatmul.f32.gmra.mxu0 %v879
  %v911 = vpop.f32.mrf.mxu0
  %v912 = vadd.f32 0.0, %v911
  %913 = vmatmul.f32.gmra.mxu0 %v882
  %v914 = vpop.f32.mrf.mxu0
  %v915 = vadd.f32 0.0, %v914
  %916 = vmatmul.f32.gmra.mxu0 %v885
  %v917 = vpop.f32.mrf.mxu0
  %v918 = vadd.f32 0.0, %v917
  %919 = vdwg.mxu0
  %s920 = scalar_lea.vmem %s4, 96
  %v921 = vld [vmem:[%s920] sm:$0xff]
  %v922 = vld [vmem:[%s920 + $0x8] sm:$0xff]
  %v923 = vld [vmem:[%s920 + $0x10] sm:$0xff]
  %v924 = vld [vmem:[%s920 + $0x18] sm:$0xff]
  %v925 = vld [vmem:[%s920 + $0x20] sm:$0xff]
  %v926 = vld [vmem:[%s920 + $0x28] sm:$0xff]
  %927 = vrot.lane.b32.xlu0 %v424, 124
  %v928 = vpop.permute.xlu0 %927
  %929 = vrot.lane.b32.xlu0 %v426, 124
  %v930 = vpop.permute.xlu0 %929
  %931 = vrot.lane.b32.xlu0 %v429, 124
  %v932 = vpop.permute.xlu0 %931
  %933 = vrot.lane.b32.xlu0 %v431, 124
  %v934 = vpop.permute.xlu0 %933
  %935 = vrot.lane.b32.xlu0 %v434, 124
  %v936 = vpop.permute.xlu0 %935
  %937 = vrot.lane.b32.xlu0 %v436, 124
  %v938 = vpop.permute.xlu0 %937
  %945 = vxpose.xlu0.b32.start [1/16] %v928, 128
  %946 = vxpose.xlu0.b32.cont [2/16] %v930, 128
  %947 = vxpose.xlu0.b32.cont [3/16] %v932, 128
  %948 = vxpose.xlu0.b32.cont [4/16] %v934, 128
  %949 = vxpose.xlu0.b32.cont [5/16] %v936, 128
  %950 = vxpose.xlu0.b32.cont [6/16] %v938, 128
  %951 = vxpose.xlu0.b32.cont [7/16] 0.0, 128
  %952 = vxpose.xlu0.b32.cont [8/16] 0.0, 128
  %953 = vxpose.xlu0.b32.cont [9/16] 0.0, 128
  %954 = vxpose.xlu0.b32.cont [10/16] 0.0, 128
  %955 = vxpose.xlu0.b32.cont [11/16] 0.0, 128
  %956 = vxpose.xlu0.b32.cont [12/16] 0.0, 128
  %957 = vxpose.xlu0.b32.cont [13/16] 0.0, 128
  %958 = vxpose.xlu0.b32.cont [14/16] 0.0, 128
  %959 = vxpose.xlu0.b32.cont [15/16] 0.0, 128
  %960 = vxpose.xlu0.b32.end [16/16] 0.0, 128
  %v961 = vpop.trf.xlu0
  %v962 = vpop.trf.xlu0
  %v963 = vpop.trf.xlu0
  %v964 = vpop.trf.xlu0
  %v965 = vpop.trf.xlu0
  %v966 = vpop.trf.xlu0
  %v967 = vpop.trf.xlu0
  %v968 = vpop.trf.xlu0
  %v969 = vpop.trf.xlu0
  %v970 = vpop.trf.xlu0
  %v971 = vpop.trf.xlu0
  %v972 = vpop.trf.xlu0
  %v973 = vpop.trf.xlu0
  %v974 = vpop.trf.xlu0
  %v975 = vpop.trf.xlu0
  %v976 = vpop.trf.xlu0
  %977 = vset.pattern.permute.xlu0 5
  %978 = vperm.xlu0 %977, %v424
  %v979 = vpop.permute.xlu0 %978
  %981 = vset.pattern.permute.xlu0 5
  %982 = vperm.xlu0 %981, %v426
  %v983 = vpop.permute.xlu0 %982
  %985 = vset.pattern.permute.xlu0 5
  %986 = vperm.xlu0 %985, %v429
  %v987 = vpop.permute.xlu0 %986
  %989 = vset.pattern.permute.xlu0 5
  %990 = vperm.xlu0 %989, %v431
  %v991 = vpop.permute.xlu0 %990
  %993 = vset.pattern.permute.xlu0 5
  %994 = vperm.xlu0 %993, %v434
  %v995 = vpop.permute.xlu0 %994
  %997 = vset.pattern.permute.xlu0 5
  %998 = vperm.xlu0 %997, %v436
  %v999 = vpop.permute.xlu0 %998
  %v1001 = vperm.slane %v961, 0
  %v1002 = vadd.f32 %v979, %v1001
  %v1003 = vadd.f32 %v983, %v1001
  %v1004 = vadd.f32 %v987, %v1001
  %v1005 = vadd.f32 %v991, %v1001
  %v1006 = vadd.f32 %v995, %v1001
  %v1007 = vadd.f32 %v999, %v1001
  %vm1008 = vcmp.gt.f32.partialorder %v921, 0.0
  %vm1009 = vcmp.gt.f32.partialorder %v922, 0.0
  %vm1010 = vcmp.gt.f32.partialorder %v923, 0.0
  %vm1011 = vcmp.gt.f32.partialorder %v924, 0.0
  %vm1012 = vcmp.gt.f32.partialorder %v925, 0.0
  %vm1013 = vcmp.gt.f32.partialorder %v926, 0.0
  %v1014 = vsel %vm1008, %v1002, -1e+30
  %v1015 = vsel %vm1009, %v1003, -1e+30
  %v1016 = vsel %vm1010, %v1004, -1e+30
  %v1017 = vsel %vm1011, %v1005, -1e+30
  %v1018 = vsel %vm1012, %v1006, -1e+30
  %v1019 = vsel %vm1013, %v1007, -1e+30
  %v1020 = vsel %vm525, %v1014, -inf
  %1021 = vmax.xlane.f32.xlu0 %v1020
  %v1022 = vpop.xlane.xlu0 %1021
  %v1023 = vsel %vm525, %v1015, -inf
  %1024 = vmax.xlane.f32.xlu0 %v1023
  %v1025 = vpop.xlane.xlu0 %1024
  %v1026 = vsel %vm525, %v1016, -inf
  %1027 = vmax.xlane.f32.xlu0 %v1026
  %v1028 = vpop.xlane.xlu0 %1027
  %v1029 = vsel %vm525, %v1017, -inf
  %1030 = vmax.xlane.f32.xlu0 %v1029
  %v1031 = vpop.xlane.xlu0 %1030
  %v1032 = vsel %vm525, %v1018, -inf
  %1033 = vmax.xlane.f32.xlu0 %v1032
  %v1034 = vpop.xlane.xlu0 %1033
  %v1035 = vsel %vm525, %v1019, -inf
  %1036 = vmax.xlane.f32.xlu0 %v1035
  %v1037 = vpop.xlane.xlu0 %1036
  %v1038 = vsub.f32 %v1014, %v1022
  %v1039 = vsub.f32 %v1015, %v1025
  %v1040 = vsub.f32 %v1016, %v1028
  %v1041 = vsub.f32 %v1017, %v1031
  %v1042 = vsub.f32 %v1018, %v1034
  %v1043 = vsub.f32 %v1019, %v1037
  %v1044 = vmul.f32 %v1038, 1.442695
  %v1045 = vpow.pop %v1044
  %v1046 = vmul.f32 %v1039, 1.442695
  %v1047 = vpow.pop %v1046
  %v1048 = vmul.f32 %v1040, 1.442695
  %v1049 = vpow.pop %v1048
  %v1050 = vmul.f32 %v1041, 1.442695
  %v1051 = vpow.pop %v1050
  %v1052 = vmul.f32 %v1042, 1.442695
  %v1053 = vpow.pop %v1052
  %v1054 = vmul.f32 %v1043, 1.442695
  %v1055 = vpow.pop %v1054
  %v1056 = vmul.f32 %v1045, %v921
  %v1057 = vmul.f32 %v1047, %v922
  %v1058 = vmul.f32 %v1049, %v923
  %v1059 = vmul.f32 %v1051, %v924
  %v1060 = vmul.f32 %v1053, %v925
  %v1061 = vmul.f32 %v1055, %v926
  %v1062 = vsel %vm525, %v1056, 0.0
  %1063 = vadd.xlane.f32.xlu0 %v1062
  %v1064 = vpop.xlane.xlu0 %1063
  %v1065 = vsel %vm525, %v1057, 0.0
  %1066 = vadd.xlane.f32.xlu0 %v1065
  %v1067 = vpop.xlane.xlu0 %1066
  %v1068 = vsel %vm525, %v1058, 0.0
  %1069 = vadd.xlane.f32.xlu0 %v1068
  %v1070 = vpop.xlane.xlu0 %1069
  %v1071 = vsel %vm525, %v1059, 0.0
  %1072 = vadd.xlane.f32.xlu0 %v1071
  %v1073 = vpop.xlane.xlu0 %1072
  %v1074 = vsel %vm525, %v1060, 0.0
  %1075 = vadd.xlane.f32.xlu0 %v1074
  %v1076 = vpop.xlane.xlu0 %1075
  %v1077 = vsel %vm525, %v1061, 0.0
  %1078 = vadd.xlane.f32.xlu0 %v1077
  %v1079 = vpop.xlane.xlu0 %1078
  %vm1080 = vcmp.gt.f32.partialorder %v1064, 0.0
  %vm1081 = vcmp.gt.f32.partialorder %v1067, 0.0
  %vm1082 = vcmp.gt.f32.partialorder %v1070, 0.0
  %vm1083 = vcmp.gt.f32.partialorder %v1073, 0.0
  %vm1084 = vcmp.gt.f32.partialorder %v1076, 0.0
  %vm1085 = vcmp.gt.f32.partialorder %v1079, 0.0
  %v1086 = vsel %vm1080, %v1064, 1.0
  %v1087 = vsel %vm1081, %v1067, 1.0
  %v1088 = vsel %vm1082, %v1070, 1.0
  %v1089 = vsel %vm1083, %v1073, 1.0
  %v1090 = vsel %vm1084, %v1076, 1.0
  %v1091 = vsel %vm1085, %v1079, 1.0
  %v1092 = vrcp.pop %v1086
  %v1093 = vrcp.pop %v1087
  %v1094 = vrcp.pop %v1088
  %v1095 = vrcp.pop %v1089
  %v1096 = vrcp.pop %v1090
  %v1097 = vrcp.pop %v1091
  %v1098 = vmul.f32 %v1056, %v1092
  %v1099 = vmul.f32 %v1057, %v1093
  %v1100 = vmul.f32 %v1058, %v1094
  %v1101 = vmul.f32 %v1059, %v1095
  %v1102 = vmul.f32 %v1060, %v1096
  %v1103 = vmul.f32 %v1061, %v1097
  %1104 = vrot.lane.b32.xlu0 %v333, 64
  %v1105 = vpop.permute.xlu0 %1104
  %1106 = vrot.lane.b32.xlu0 %v335, 64
  %v1107 = vpop.permute.xlu0 %1106
  %1108 = vrot.lane.b32.xlu0 %v338, 64
  %v1109 = vpop.permute.xlu0 %1108
  %1110 = vrot.lane.b32.xlu0 %v340, 64
  %v1111 = vpop.permute.xlu0 %1110
  %1112 = vrot.lane.b32.xlu0 %v343, 64
  %v1113 = vpop.permute.xlu0 %1112
  %1114 = vrot.lane.b32.xlu0 %v345, 64
  %v1115 = vpop.permute.xlu0 %1114
  %v1123 = vsel %vm525, %v1098, 0
  %v1126 = vsel %vm525, %v1099, 0
  %v1129 = vsel %vm525, %v1100, 0
  %v1132 = vsel %vm525, %v1101, 0
  %v1135 = vsel %vm525, %v1102, 0
  %v1138 = vsel %vm525, %v1103, 0
  %1140 = vmatpush.msra.mxu0 0.0
  %1141 = vmatpush.msra.mxu0 0.0
  %1142 = vmatpush.msra.mxu0 0.0
  %1143 = vmatpush.msra.mxu0 0.0
  %1144 = vmatpush.msra.mxu0 0.0
  %1145 = vmatpush.msra.mxu0 0.0
  %1146 = vmatpush.msra.mxu0 0.0
  %1147 = vmatpush.msra.mxu0 0.0
  %1148 = vmatpush.msra.mxu0 0.0
  %1149 = vmatpush.msra.mxu0 0.0
  %1150 = vmatpush.msra.mxu0 %v1115
  %1151 = vmatpush.msra.mxu0 %v1113
  %1152 = vmatpush.msra.mxu0 %v1111
  %1153 = vmatpush.msra.mxu0 %v1109
  %1154 = vmatpush.msra.mxu0 %v1107
  %1155 = vmatpush.msra.mxu0 %v1105
  %1156 = vmatmul.f32.gmra.mxu0 %v1123
  %v1157 = vpop.f32.mrf.mxu0
  %1158 = vmatmul.f32.gmra.mxu0 %v1126
  %v1159 = vpop.f32.mrf.mxu0
  %1160 = vmatmul.f32.gmra.mxu0 %v1129
  %v1161 = vpop.f32.mrf.mxu0
  %v1162 = vadd.f32 0.0, %v1161
  %1163 = vmatmul.f32.gmra.mxu0 %v1132
  %v1164 = vpop.f32.mrf.mxu0
  %v1165 = vadd.f32 0.0, %v1164
  %1166 = vmatmul.f32.gmra.mxu0 %v1135
  %v1167 = vpop.f32.mrf.mxu0
  %v1168 = vadd.f32 0.0, %v1167
  %1169 = vmatmul.f32.gmra.mxu0 %v1138
  %v1170 = vpop.f32.mrf.mxu0
  %v1171 = vadd.f32 0.0, %v1170
  %1172 = vdwg.mxu0
  %s1173 = scalar_lea.vmem %s4, 144
  %v1174 = vld [vmem:[%s1173] sm:$0xff]
  %v1175 = vld [vmem:[%s1173 + $0x8] sm:$0xff]
  %v1176 = vld [vmem:[%s1173 + $0x10] sm:$0xff]
  %v1177 = vld [vmem:[%s1173 + $0x18] sm:$0xff]
  %v1178 = vld [vmem:[%s1173 + $0x20] sm:$0xff]
  %v1179 = vld [vmem:[%s1173 + $0x28] sm:$0xff]
  %1180 = vrot.lane.b32.xlu0 %v424, 122
  %v1181 = vpop.permute.xlu0 %1180
  %1182 = vrot.lane.b32.xlu0 %v426, 122
  %v1183 = vpop.permute.xlu0 %1182
  %1184 = vrot.lane.b32.xlu0 %v429, 122
  %v1185 = vpop.permute.xlu0 %1184
  %1186 = vrot.lane.b32.xlu0 %v431, 122
  %v1187 = vpop.permute.xlu0 %1186
  %1188 = vrot.lane.b32.xlu0 %v434, 122
  %v1189 = vpop.permute.xlu0 %1188
  %1190 = vrot.lane.b32.xlu0 %v436, 122
  %v1191 = vpop.permute.xlu0 %1190
  %1198 = vxpose.xlu0.b32.start [1/16] %v1181, 128
  %1199 = vxpose.xlu0.b32.cont [2/16] %v1183, 128
  %1200 = vxpose.xlu0.b32.cont [3/16] %v1185, 128
  %1201 = vxpose.xlu0.b32.cont [4/16] %v1187, 128
  %1202 = vxpose.xlu0.b32.cont [5/16] %v1189, 128
  %1203 = vxpose.xlu0.b32.cont [6/16] %v1191, 128
  %1204 = vxpose.xlu0.b32.cont [7/16] 0.0, 128
  %1205 = vxpose.xlu0.b32.cont [8/16] 0.0, 128
  %1206 = vxpose.xlu0.b32.cont [9/16] 0.0, 128
  %1207 = vxpose.xlu0.b32.cont [10/16] 0.0, 128
  %1208 = vxpose.xlu0.b32.cont [11/16] 0.0, 128
  %1209 = vxpose.xlu0.b32.cont [12/16] 0.0, 128
  %1210 = vxpose.xlu0.b32.cont [13/16] 0.0, 128
  %1211 = vxpose.xlu0.b32.cont [14/16] 0.0, 128
  %1212 = vxpose.xlu0.b32.cont [15/16] 0.0, 128
  %1213 = vxpose.xlu0.b32.end [16/16] 0.0, 128
  %v1214 = vpop.trf.xlu0
  %v1215 = vpop.trf.xlu0
  %v1216 = vpop.trf.xlu0
  %v1217 = vpop.trf.xlu0
  %v1218 = vpop.trf.xlu0
  %v1219 = vpop.trf.xlu0
  %v1220 = vpop.trf.xlu0
  %v1221 = vpop.trf.xlu0
  %v1222 = vpop.trf.xlu0
  %v1223 = vpop.trf.xlu0
  %v1224 = vpop.trf.xlu0
  %v1225 = vpop.trf.xlu0
  %v1226 = vpop.trf.xlu0
  %v1227 = vpop.trf.xlu0
  %v1228 = vpop.trf.xlu0
  %v1229 = vpop.trf.xlu0
  %1230 = vset.pattern.permute.xlu0 7
  %1231 = vperm.xlu0 %1230, %v424
  %v1232 = vpop.permute.xlu0 %1231
  %1234 = vset.pattern.permute.xlu0 7
  %1235 = vperm.xlu0 %1234, %v426
  %v1236 = vpop.permute.xlu0 %1235
  %1238 = vset.pattern.permute.xlu0 7
  %1239 = vperm.xlu0 %1238, %v429
  %v1240 = vpop.permute.xlu0 %1239
  %1242 = vset.pattern.permute.xlu0 7
  %1243 = vperm.xlu0 %1242, %v431
  %v1244 = vpop.permute.xlu0 %1243
  %1246 = vset.pattern.permute.xlu0 7
  %1247 = vperm.xlu0 %1246, %v434
  %v1248 = vpop.permute.xlu0 %1247
  %1250 = vset.pattern.permute.xlu0 7
  %1251 = vperm.xlu0 %1250, %v436
  %v1252 = vpop.permute.xlu0 %1251
  %v1254 = vperm.slane %v1214, 0
  %v1255 = vadd.f32 %v1232, %v1254
  %v1256 = vadd.f32 %v1236, %v1254
  %v1257 = vadd.f32 %v1240, %v1254
  %v1258 = vadd.f32 %v1244, %v1254
  %v1259 = vadd.f32 %v1248, %v1254
  %v1260 = vadd.f32 %v1252, %v1254
  %vm1261 = vcmp.gt.f32.partialorder %v1174, 0.0
  %vm1262 = vcmp.gt.f32.partialorder %v1175, 0.0
  %vm1263 = vcmp.gt.f32.partialorder %v1176, 0.0
  %vm1264 = vcmp.gt.f32.partialorder %v1177, 0.0
  %vm1265 = vcmp.gt.f32.partialorder %v1178, 0.0
  %vm1266 = vcmp.gt.f32.partialorder %v1179, 0.0
  %v1267 = vsel %vm1261, %v1255, -1e+30
  %v1268 = vsel %vm1262, %v1256, -1e+30
  %v1269 = vsel %vm1263, %v1257, -1e+30
  %v1270 = vsel %vm1264, %v1258, -1e+30
  %v1271 = vsel %vm1265, %v1259, -1e+30
  %v1272 = vsel %vm1266, %v1260, -1e+30
  %v1273 = vsel %vm525, %v1267, -inf
  %1274 = vmax.xlane.f32.xlu0 %v1273
  %v1275 = vpop.xlane.xlu0 %1274
  %v1276 = vsel %vm525, %v1268, -inf
  %1277 = vmax.xlane.f32.xlu0 %v1276
  %v1278 = vpop.xlane.xlu0 %1277
  %v1279 = vsel %vm525, %v1269, -inf
  %1280 = vmax.xlane.f32.xlu0 %v1279
  %v1281 = vpop.xlane.xlu0 %1280
  %v1282 = vsel %vm525, %v1270, -inf
  %1283 = vmax.xlane.f32.xlu0 %v1282
  %v1284 = vpop.xlane.xlu0 %1283
  %v1285 = vsel %vm525, %v1271, -inf
  %1286 = vmax.xlane.f32.xlu0 %v1285
  %v1287 = vpop.xlane.xlu0 %1286
  %v1288 = vsel %vm525, %v1272, -inf
  %1289 = vmax.xlane.f32.xlu0 %v1288
  %v1290 = vpop.xlane.xlu0 %1289
  %v1291 = vsub.f32 %v1267, %v1275
  %v1292 = vsub.f32 %v1268, %v1278
  %v1293 = vsub.f32 %v1269, %v1281
  %v1294 = vsub.f32 %v1270, %v1284
  %v1295 = vsub.f32 %v1271, %v1287
  %v1296 = vsub.f32 %v1272, %v1290
  %v1297 = vmul.f32 %v1291, 1.442695
  %v1298 = vpow.pop %v1297
  %v1299 = vmul.f32 %v1292, 1.442695
  %v1300 = vpow.pop %v1299
  %v1301 = vmul.f32 %v1293, 1.442695
  %v1302 = vpow.pop %v1301
  %v1303 = vmul.f32 %v1294, 1.442695
  %v1304 = vpow.pop %v1303
  %v1305 = vmul.f32 %v1295, 1.442695
  %v1306 = vpow.pop %v1305
  %v1307 = vmul.f32 %v1296, 1.442695
  %v1308 = vpow.pop %v1307
  %v1309 = vmul.f32 %v1298, %v1174
  %v1310 = vmul.f32 %v1300, %v1175
  %v1311 = vmul.f32 %v1302, %v1176
  %v1312 = vmul.f32 %v1304, %v1177
  %v1313 = vmul.f32 %v1306, %v1178
  %v1314 = vmul.f32 %v1308, %v1179
  %v1315 = vsel %vm525, %v1309, 0.0
  %1316 = vadd.xlane.f32.xlu0 %v1315
  %v1317 = vpop.xlane.xlu0 %1316
  %v1318 = vsel %vm525, %v1310, 0.0
  %1319 = vadd.xlane.f32.xlu0 %v1318
  %v1320 = vpop.xlane.xlu0 %1319
  %v1321 = vsel %vm525, %v1311, 0.0
  %1322 = vadd.xlane.f32.xlu0 %v1321
  %v1323 = vpop.xlane.xlu0 %1322
  %v1324 = vsel %vm525, %v1312, 0.0
  %1325 = vadd.xlane.f32.xlu0 %v1324
  %v1326 = vpop.xlane.xlu0 %1325
  %v1327 = vsel %vm525, %v1313, 0.0
  %1328 = vadd.xlane.f32.xlu0 %v1327
  %v1329 = vpop.xlane.xlu0 %1328
  %v1330 = vsel %vm525, %v1314, 0.0
  %1331 = vadd.xlane.f32.xlu0 %v1330
  %v1332 = vpop.xlane.xlu0 %1331
  %vm1333 = vcmp.gt.f32.partialorder %v1317, 0.0
  %vm1334 = vcmp.gt.f32.partialorder %v1320, 0.0
  %vm1335 = vcmp.gt.f32.partialorder %v1323, 0.0
  %vm1336 = vcmp.gt.f32.partialorder %v1326, 0.0
  %vm1337 = vcmp.gt.f32.partialorder %v1329, 0.0
  %vm1338 = vcmp.gt.f32.partialorder %v1332, 0.0
  %v1339 = vsel %vm1333, %v1317, 1.0
  %v1340 = vsel %vm1334, %v1320, 1.0
  %v1341 = vsel %vm1335, %v1323, 1.0
  %v1342 = vsel %vm1336, %v1326, 1.0
  %v1343 = vsel %vm1337, %v1329, 1.0
  %v1344 = vsel %vm1338, %v1332, 1.0
  %v1345 = vrcp.pop %v1339
  %v1346 = vrcp.pop %v1340
  %v1347 = vrcp.pop %v1341
  %v1348 = vrcp.pop %v1342
  %v1349 = vrcp.pop %v1343
  %v1350 = vrcp.pop %v1344
  %v1351 = vmul.f32 %v1309, %v1345
  %v1352 = vmul.f32 %v1310, %v1346
  %v1353 = vmul.f32 %v1311, %v1347
  %v1354 = vmul.f32 %v1312, %v1348
  %v1355 = vmul.f32 %v1313, %v1349
  %v1356 = vmul.f32 %v1314, %v1350
  %1357 = vrot.lane.b32.xlu0 %v333, 32
  %v1358 = vpop.permute.xlu0 %1357
  %1359 = vrot.lane.b32.xlu0 %v335, 32
  %v1360 = vpop.permute.xlu0 %1359
  %1361 = vrot.lane.b32.xlu0 %v338, 32
  %v1362 = vpop.permute.xlu0 %1361
  %1363 = vrot.lane.b32.xlu0 %v340, 32
  %v1364 = vpop.permute.xlu0 %1363
  %1365 = vrot.lane.b32.xlu0 %v343, 32
  %v1366 = vpop.permute.xlu0 %1365
  %1367 = vrot.lane.b32.xlu0 %v345, 32
  %v1368 = vpop.permute.xlu0 %1367
  %v1376 = vsel %vm525, %v1351, 0
  %v1379 = vsel %vm525, %v1352, 0
  %v1382 = vsel %vm525, %v1353, 0
  %v1385 = vsel %vm525, %v1354, 0
  %v1388 = vsel %vm525, %v1355, 0
  %v1391 = vsel %vm525, %v1356, 0
  %1393 = vmatpush.msra.mxu0 0.0
  %1394 = vmatpush.msra.mxu0 0.0
  %1395 = vmatpush.msra.mxu0 0.0
  %1396 = vmatpush.msra.mxu0 0.0
  %1397 = vmatpush.msra.mxu0 0.0
  %1398 = vmatpush.msra.mxu0 0.0
  %1399 = vmatpush.msra.mxu0 0.0
  %1400 = vmatpush.msra.mxu0 0.0
  %1401 = vmatpush.msra.mxu0 0.0
  %1402 = vmatpush.msra.mxu0 0.0
  %1403 = vmatpush.msra.mxu0 %v1368
  %1404 = vmatpush.msra.mxu0 %v1366
  %1405 = vmatpush.msra.mxu0 %v1364
  %1406 = vmatpush.msra.mxu0 %v1362
  %1407 = vmatpush.msra.mxu0 %v1360
  %1408 = vmatpush.msra.mxu0 %v1358
  %1409 = vmatmul.f32.gmra.mxu0 %v1376
  %v1410 = vpop.f32.mrf.mxu0
  %v1411 = vadd.f32 0.0, %v1410
  %1412 = vmatmul.f32.gmra.mxu0 %v1379
  %v1413 = vpop.f32.mrf.mxu0
  %v1414 = vadd.f32 0.0, %v1413
  %1415 = vmatmul.f32.gmra.mxu0 %v1382
  %v1416 = vpop.f32.mrf.mxu0
  %1417 = vmatmul.f32.gmra.mxu0 %v1385
  %v1418 = vpop.f32.mrf.mxu0
  %1419 = vmatmul.f32.gmra.mxu0 %v1388
  %v1420 = vpop.f32.mrf.mxu0
  %1421 = vmatmul.f32.gmra.mxu0 %v1391
  %v1422 = vpop.f32.mrf.mxu0
  %1423 = vdwg.mxu0
  %v1424 = vadd.f32 %v650, %v909
  %v1425 = vadd.f32 %v653, %v912
  %v1426 = vadd.f32 %v656, %v915
  %v1427 = vadd.f32 %v659, %v918
  %v1428 = vadd.f32 %v1424, %v1162
  %v1429 = vadd.f32 %v1425, %v1165
  %v1430 = vadd.f32 %v1426, %v1168
  %v1431 = vadd.f32 %v1427, %v1171
  %v1432 = vld [vmem:[%s7] sm:$0xf]
  %v1433 = vxor.u32 %v1411, 2147483648
  %v1434 = vxor.u32 %v1414, 2147483648
  %v1435 = vmul.f32 %v1433, 1.442695
  %v1436 = vpow.pop %v1435
  %v1437 = vmul.f32 %v1434, 1.442695
  %v1438 = vpow.pop %v1437
  %v1439 = vadd.f32 %v1436, 1.0
  %v1440 = vadd.f32 %v1438, 1.0
  %v1441 = vrcp.pop %v1439
  %v1442 = vmul.f32 %v1439, %v1441
  %v1443 = vsub.f32 1.0, %v1442
  %v1444 = vmul.f32 %v1441, %v1443
  %v1445 = vadd.f32 %v1441, %v1444
  %vm1446 = vweird.f32 %v1439
  %vm1447 = vweird.f32 %v1441
  %vm1448 = vmor %vm1446, %vm1447
  %v1449 = vsel %vm1448, %v1441, %v1445
  %v1450 = vand.u32 2147483647, %v1439
  %vm1451 = vcmp.eq.f32.partialorder %v1450, 8.507059e+37
  %v1452 = vand.u32 %v1439, 2147483648
  %v1453 = vor.u32 1.1754944e-38, %v1452
  %v1454 = vsel %vm1451, %v1453, %v1449
  %v1455 = vmul.f32 1.0, %v1454
  %v1456 = vrcp.pop %v1440
  %v1457 = vmul.f32 %v1440, %v1456
  %v1458 = vsub.f32 1.0, %v1457
  %v1459 = vmul.f32 %v1456, %v1458
  %v1460 = vadd.f32 %v1456, %v1459
  %vm1461 = vweird.f32 %v1440
  %vm1462 = vweird.f32 %v1456
  %vm1463 = vmor %vm1461, %vm1462
  %v1464 = vsel %vm1463, %v1456, %v1460
  %v1465 = vand.u32 2147483647, %v1440
  %vm1466 = vcmp.eq.f32.partialorder %v1465, 8.507059e+37
  %v1467 = vand.u32 %v1440, 2147483648
  %v1468 = vor.u32 1.1754944e-38, %v1467
  %v1469 = vsel %vm1466, %v1468, %v1464
  %v1470 = vmul.f32 1.0, %v1469
  %v1471 = vxor.u32 %v1428, 2147483648
  %v1472 = vxor.u32 %v1429, 2147483648
  %v1473 = vxor.u32 %v1430, 2147483648
  %v1474 = vxor.u32 %v1431, 2147483648
  %v1475 = vmul.f32 %v1471, 1.442695
  %v1476 = vpow.pop %v1475
  %v1477 = vmul.f32 %v1472, 1.442695
  %v1478 = vpow.pop %v1477
  %v1479 = vmul.f32 %v1473, 1.442695
  %v1480 = vpow.pop %v1479
  %v1481 = vmul.f32 %v1474, 1.442695
  %v1482 = vpow.pop %v1481
  %v1483 = vadd.f32 %v1476, 1.0
  %v1484 = vadd.f32 %v1478, 1.0
  %v1485 = vadd.f32 %v1480, 1.0
  %v1486 = vadd.f32 %v1482, 1.0
  %v1487 = vrcp.pop %v1483
  %v1488 = vmul.f32 %v1483, %v1487
  %v1489 = vsub.f32 1.0, %v1488
  %v1490 = vmul.f32 %v1487, %v1489
  %v1491 = vadd.f32 %v1487, %v1490
  %vm1492 = vweird.f32 %v1483
  %vm1493 = vweird.f32 %v1487
  %vm1494 = vmor %vm1492, %vm1493
  %v1495 = vsel %vm1494, %v1487, %v1491
  %v1496 = vand.u32 2147483647, %v1483
  %vm1497 = vcmp.eq.f32.partialorder %v1496, 8.507059e+37
  %v1498 = vand.u32 %v1483, 2147483648
  %v1499 = vor.u32 1.1754944e-38, %v1498
  %v1500 = vsel %vm1497, %v1499, %v1495
  %v1501 = vmul.f32 1.0, %v1500
  %v1502 = vrcp.pop %v1484
  %v1503 = vmul.f32 %v1484, %v1502
  %v1504 = vsub.f32 1.0, %v1503
  %v1505 = vmul.f32 %v1502, %v1504
  %v1506 = vadd.f32 %v1502, %v1505
  %vm1507 = vweird.f32 %v1484
  %vm1508 = vweird.f32 %v1502
  %vm1509 = vmor %vm1507, %vm1508
  %v1510 = vsel %vm1509, %v1502, %v1506
  %v1511 = vand.u32 2147483647, %v1484
  %vm1512 = vcmp.eq.f32.partialorder %v1511, 8.507059e+37
  %v1513 = vand.u32 %v1484, 2147483648
  %v1514 = vor.u32 1.1754944e-38, %v1513
  %v1515 = vsel %vm1512, %v1514, %v1510
  %v1516 = vmul.f32 1.0, %v1515
  %v1517 = vrcp.pop %v1485
  %v1518 = vmul.f32 %v1485, %v1517
  %v1519 = vsub.f32 1.0, %v1518
  %v1520 = vmul.f32 %v1517, %v1519
  %v1521 = vadd.f32 %v1517, %v1520
  %vm1522 = vweird.f32 %v1485
  %vm1523 = vweird.f32 %v1517
  %vm1524 = vmor %vm1522, %vm1523
  %v1525 = vsel %vm1524, %v1517, %v1521
  %v1526 = vand.u32 2147483647, %v1485
  %vm1527 = vcmp.eq.f32.partialorder %v1526, 8.507059e+37
  %v1528 = vand.u32 %v1485, 2147483648
  %v1529 = vor.u32 1.1754944e-38, %v1528
  %v1530 = vsel %vm1527, %v1529, %v1525
  %v1531 = vmul.f32 1.0, %v1530
  %v1532 = vrcp.pop %v1486
  %v1533 = vmul.f32 %v1486, %v1532
  %v1534 = vsub.f32 1.0, %v1533
  %v1535 = vmul.f32 %v1532, %v1534
  %v1536 = vadd.f32 %v1532, %v1535
  %vm1537 = vweird.f32 %v1486
  %vm1538 = vweird.f32 %v1532
  %vm1539 = vmor %vm1537, %vm1538
  %v1540 = vsel %vm1539, %v1532, %v1536
  %v1541 = vand.u32 2147483647, %v1486
  %vm1542 = vcmp.eq.f32.partialorder %v1541, 8.507059e+37
  %v1543 = vand.u32 %v1486, 2147483648
  %v1544 = vor.u32 1.1754944e-38, %v1543
  %v1545 = vsel %vm1542, %v1544, %v1540
  %v1546 = vmul.f32 1.0, %v1545
  %v1547 = vld [vmem:[%s8] sm:$0x3]
  %v1548 = vxor.u32 %v1547, 2147483648
  %v1549 = vmul.f32 %v1548, 1.442695
  %v1550 = vpow.pop %v1549
  %v1551 = vadd.f32 %v1550, 1.0
  %v1552 = vrcp.pop %v1551
  %v1553 = vmul.f32 %v1551, %v1552
  %v1554 = vsub.f32 1.0, %v1553
  %v1555 = vmul.f32 %v1552, %v1554
  %v1556 = vadd.f32 %v1552, %v1555
  %vm1557 = vweird.f32 %v1551
  %vm1558 = vweird.f32 %v1552
  %vm1559 = vmor %vm1557, %vm1558
  %v1560 = vsel %vm1559, %v1552, %v1556
  %v1561 = vand.u32 2147483647, %v1551
  %vm1562 = vcmp.eq.f32.partialorder %v1561, 8.507059e+37
  %v1563 = vand.u32 %v1551, 2147483648
  %v1564 = vor.u32 1.1754944e-38, %v1563
  %v1565 = vsel %vm1562, %v1564, %v1560
  %v1566 = vmul.f32 1.0, %v1565
  %vm1567 = vcmask 130048
  %v1569 = vsel %vm1567, %v1432, 0
  %1571 = vmatpush.msra.mxu0 0.0
  %1572 = vmatpush.msra.mxu0 0.0
  %1573 = vmatpush.msra.mxu0 0.0
  %1574 = vmatpush.msra.mxu0 0.0
  %1575 = vmatpush.msra.mxu0 0.0
  %1576 = vmatpush.msra.mxu0 0.0
  %1577 = vmatpush.msra.mxu0 0.0
  %1578 = vmatpush.msra.mxu0 0.0
  %1579 = vmatpush.msra.mxu0 0.0
  %1580 = vmatpush.msra.mxu0 0.0
  %1581 = vmatpush.msra.mxu0 0.0
  %1582 = vmatpush.msra.mxu0 0.0
  %1583 = vmatpush.msra.mxu0 0.0
  %1584 = vmatpush.msra.mxu0 0.0
  %1585 = vmatpush.msra.mxu0 %v1470
  %1586 = vmatpush.msra.mxu0 %v1455
  %1587 = vmatmul.f32.gmra.mxu0 %v1569
  %v1588 = vpop.f32.mrf.mxu0
  %v1589 = vadd.f32 0.0, %v1588
  %1590 = vdwg.mxu0
  %1591 = vrot.lane.b32.xlu0 %v1432, 112
  %v1592 = vpop.permute.xlu0 %1591
  %vm1593 = vcmask 261120
  %v1594 = vsel %vm1593, %v1592, 0
  %1596 = vmatpush.msra.mxu0 0.0
  %1597 = vmatpush.msra.mxu0 0.0
  %1598 = vmatpush.msra.mxu0 0.0
  %1599 = vmatpush.msra.mxu0 0.0
  %1600 = vmatpush.msra.mxu0 0.0
  %1601 = vmatpush.msra.mxu0 0.0
  %1602 = vmatpush.msra.mxu0 0.0
  %1603 = vmatpush.msra.mxu0 0.0
  %1604 = vmatpush.msra.mxu0 0.0
  %1605 = vmatpush.msra.mxu0 0.0
  %1606 = vmatpush.msra.mxu0 0.0
  %1607 = vmatpush.msra.mxu0 0.0
  %1608 = vmatpush.msra.mxu0 %v1546
  %1609 = vmatpush.msra.mxu0 %v1531
  %1610 = vmatpush.msra.mxu0 %v1516
  %1611 = vmatpush.msra.mxu0 %v1501
  %1612 = vmatmul.f32.gmra.mxu0 %v1594
  %v1613 = vpop.f32.mrf.mxu0
  %v1614 = vadd.f32 0.0, %v1613
  %1615 = vdwg.mxu0
  %1616 = vrot.lane.b32.xlu0 %v1432, 80
  %v1617 = vpop.permute.xlu0 %1616
  %vm1618 = vcmask 15360
  %v1619 = vsel %vm1618, %v1617, 0
  %vm1621 = vcmask 1041408
  %v1623 = vsel %vm1621, %v1566, 0
  %1625 = vmatpush.msra.mxu0 0.0
  %1626 = vmatpush.msra.mxu0 0.0
  %1627 = vmatpush.msra.mxu0 0.0
  %1628 = vmatpush.msra.mxu0 0.0
  %1629 = vmatpush.msra.mxu0 0.0
  %1630 = vmatpush.msra.mxu0 0.0
  %1631 = vmatpush.msra.mxu0 0.0
  %1632 = vmatpush.msra.mxu0 0.0
  %1633 = vmatpush.msra.mxu0 0.0
  %1634 = vmatpush.msra.mxu0 0.0
  %1635 = vmatpush.msra.mxu0 0.0
  %1636 = vmatpush.msra.mxu0 0.0
  %1637 = vmatpush.msra.mxu0 0.0
  %1638 = vmatpush.msra.mxu0 0.0
  %1639 = vmatpush.msra.mxu0 0.0
  %1640 = vmatpush.msra.mxu0 %v1623
  %1641 = vmatmul.f32.gmra.mxu0 %v1619
  %v1642 = vpop.f32.mrf.mxu0
  %v1643 = vadd.f32 0.0, %v1642
  %1644 = vdwg.mxu0
  %1646 = vrot.lane.b32.xlu0 %v1614, 32
  %v1647 = vpop.permute.xlu0 %1646
  %1650 = vrot.lane.b32.xlu0 %v1643, 64
  %v1651 = vpop.permute.xlu0 %1650
  %v1653 = vsel %vm1593, %v1589, %v1647
  %vm1654 = vcmask 523264
  %v1655 = vsel %vm1654, %v1653, %v1651
  %v1656 = vpack.c.bf16 %v1655, %v1655
  %v1657 = vld [vmem:[%s10] sm:$0xf]
  %v1658 = vld [vmem:[%s10 + $0x4] sm:$0xf]
  %v1659 = vld [vmem:[%s10 + $0x8] sm:$0xf]
  %v1660 = vld [vmem:[%s10 + $0xc] sm:$0xf]
  %v1661 = vld [vmem:[%s10 + $0x10] sm:$0xf]
  %v1662 = vld [vmem:[%s10 + $0x14] sm:$0xf]
  %v1663 = vld [vmem:[%s10 + $0x18] sm:$0xf]
  %v1664 = vld [vmem:[%s10 + $0x1c] sm:$0xf]
  %v1665 = vld [vmem:[%s10 + $0x20] sm:$0xf]
  %v1666 = vld [vmem:[%s10 + $0x24] sm:$0xf]
  %v1667 = vld [vmem:[%s10 + $0x28] sm:$0xf]
  %v1668 = vld [vmem:[%s10 + $0x2c] sm:$0xf]
  %v1669 = vld [vmem:[%s11] sm:$0x1]
  %v1671 = vperm.slane %v1669, 0
  %v1685 = vunpack.c.l.b16 %v1657
  %v1686 = vunpack.c.l.b16 %v1658
  %v1687 = vunpack.c.l.b16 %v1659
  %v1688 = vunpack.c.l.b16 %v1660
  %v1689 = vunpack.c.l.b16 %v1661
  %v1690 = vunpack.c.l.b16 %v1662
  %v1691 = vunpack.c.l.b16 %v1663
  %v1692 = vunpack.c.l.b16 %v1664
  %v1693 = vunpack.c.l.b16 %v1665
  %v1694 = vunpack.c.l.b16 %v1666
  %v1695 = vunpack.c.l.b16 %v1667
  %v1696 = vunpack.c.l.b16 %v1668
  %v1697 = vpack.c.b16 %v1686, %v1685
  %v1698 = vpack.c.b16 %v1688, %v1687
  %v1699 = vpack.c.b16 %v1690, %v1689
  %v1700 = vpack.c.b16 %v1692, %v1691
  %v1701 = vpack.c.b16 %v1694, %v1693
  %v1702 = vpack.c.b16 %v1696, %v1695
  %vm1709 = vcmask 785408
  %v1711 = vsel %vm1709, %v1656, 0
  %1713 = vmatpush.bf16.msra.mxu0 0
  %1714 = vmatpush.bf16.msra.mxu0 0
  %1715 = vmatpush.bf16.msra.mxu0 %v1702
  %1716 = vmatpush.bf16.msra.mxu0 %v1701
  %1717 = vmatpush.bf16.msra.mxu0 %v1700
  %1718 = vmatpush.bf16.msra.mxu0 %v1699
  %1719 = vmatpush.bf16.msra.mxu0 %v1698
  %1720 = vmatpush.bf16.msra.mxu0 %v1697
  %1721 = vmatmul.bf16.gmra.mxu0 %v1711
  %v1722 = vpop.f32.mrf.mxu0
  %v1723 = vadd.f32 %v1671, %v1722
  %v1724 = vpop.f32.mrf.mxu0
  %1725 = vdwg.mxu0
  %v1726 = vmax.f32 %v1723, 0.0
  %v1727 = vld [vmem:[%s1] sm:$0xff]
  %v1728 = vld [vmem:[%s1 + $0x8] sm:$0xff]
  %v1729 = vld [vmem:[%s1 + $0x10] sm:$0xff]
  %v1730 = vpack.c.bf16 %v1727, %v1727
  %v1731 = vpack.c.bf16 %v1728, %v1728
  %v1732 = vpack.c.bf16 %v1729, %v1729
  %v1733 = vld [vmem:[%s5] sm:$0xff]
  %v1734 = vld [vmem:[%s5 + $0x8] sm:$0xff]
  %v1735 = vld [vmem:[%s5 + $0x10] sm:$0xff]
  %v1736 = vld [vmem:[%s5 + $0x18] sm:$0xff]
  %v1737 = vld [vmem:[%s5 + $0x20] sm:$0xff]
  %v1738 = vld [vmem:[%s5 + $0x28] sm:$0xff]
  %v1739 = vld [vmem:[%s5 + $0x30] sm:$0xff]
  %v1740 = vld [vmem:[%s5 + $0x38] sm:$0xff]
  %v1741 = vld [vmem:[%s5 + $0x40] sm:$0xff]
  %v1742 = vld [vmem:[%s5 + $0x48] sm:$0xff]
  %v1743 = vld [vmem:[%s5 + $0x50] sm:$0xff]
  %v1744 = vld [vmem:[%s5 + $0x58] sm:$0xff]
  %v1745 = vld [vmem:[%s5 + $0x60] sm:$0xff]
  %v1746 = vld [vmem:[%s5 + $0x68] sm:$0xff]
  %v1747 = vld [vmem:[%s5 + $0x70] sm:$0xff]
  %v1748 = vld [vmem:[%s5 + $0x78] sm:$0xff]
  %v1749 = vld [vmem:[%s5 + $0x80] sm:$0xff]
  %v1750 = vld [vmem:[%s5 + $0x88] sm:$0xff]
  %v1751 = vld [vmem:[%s5 + $0x90] sm:$0xff]
  %v1752 = vld [vmem:[%s5 + $0x98] sm:$0xff]
  %v1753 = vld [vmem:[%s5 + $0xa0] sm:$0xff]
  %v1754 = vld [vmem:[%s5 + $0xa8] sm:$0xff]
  %v1755 = vld [vmem:[%s5 + $0xb0] sm:$0xff]
  %v1756 = vld [vmem:[%s5 + $0xb8] sm:$0xff]
  %v1757 = vld [vmem:[%s5 + $0xc0] sm:$0xff]
  %v1758 = vld [vmem:[%s5 + $0xc8] sm:$0xff]
  %v1759 = vld [vmem:[%s5 + $0xd0] sm:$0xff]
  %v1760 = vld [vmem:[%s5 + $0xd8] sm:$0xff]
  %v1761 = vld [vmem:[%s5 + $0xe0] sm:$0xff]
  %v1762 = vld [vmem:[%s5 + $0xe8] sm:$0xff]
  %v1763 = vld [vmem:[%s5 + $0xf0] sm:$0xff]
  %v1764 = vld [vmem:[%s5 + $0xf8] sm:$0xff]
  %v1765 = vld [vmem:[%s5 + $0x100] sm:$0xff]
  %v1766 = vld [vmem:[%s5 + $0x108] sm:$0xff]
  %v1767 = vld [vmem:[%s5 + $0x110] sm:$0xff]
  %v1768 = vld [vmem:[%s5 + $0x118] sm:$0xff]
  %v1769 = vld [vmem:[%s5 + $0x120] sm:$0xff]
  %v1770 = vld [vmem:[%s5 + $0x128] sm:$0xff]
  %v1771 = vld [vmem:[%s5 + $0x130] sm:$0xff]
  %v1772 = vld [vmem:[%s5 + $0x138] sm:$0xff]
  %v1773 = vld [vmem:[%s5 + $0x140] sm:$0xff]
  %v1774 = vld [vmem:[%s5 + $0x148] sm:$0xff]
  %v1775 = vld [vmem:[%s5 + $0x150] sm:$0xff]
  %v1776 = vld [vmem:[%s5 + $0x158] sm:$0xff]
  %v1777 = vld [vmem:[%s5 + $0x160] sm:$0xff]
  %v1778 = vld [vmem:[%s5 + $0x168] sm:$0xff]
  %v1779 = vld [vmem:[%s5 + $0x170] sm:$0xff]
  %v1780 = vld [vmem:[%s5 + $0x178] sm:$0xff]
  %v1781 = vld [vmem:[%s6] sm:$0x3]
  %v1783 = vperm.slane %v1781, 0
  %v1784 = vperm.slane %v1781, 1
  %v1835 = vunpack.c.l.b16 %v1733
  %v1836 = vunpack.c.h.b16 %v1733
  %v1837 = vunpack.c.l.b16 %v1734
  %v1838 = vunpack.c.h.b16 %v1734
  %v1839 = vunpack.c.l.b16 %v1735
  %v1840 = vunpack.c.h.b16 %v1735
  %v1841 = vunpack.c.l.b16 %v1736
  %v1842 = vunpack.c.h.b16 %v1736
  %v1843 = vunpack.c.l.b16 %v1737
  %v1844 = vunpack.c.h.b16 %v1737
  %v1845 = vunpack.c.l.b16 %v1738
  %v1846 = vunpack.c.h.b16 %v1738
  %v1847 = vunpack.c.l.b16 %v1739
  %v1848 = vunpack.c.h.b16 %v1739
  %v1849 = vunpack.c.l.b16 %v1740
  %v1850 = vunpack.c.h.b16 %v1740
  %v1851 = vunpack.c.l.b16 %v1741
  %v1852 = vunpack.c.h.b16 %v1741
  %v1853 = vunpack.c.l.b16 %v1742
  %v1854 = vunpack.c.h.b16 %v1742
  %v1855 = vunpack.c.l.b16 %v1743
  %v1856 = vunpack.c.h.b16 %v1743
  %v1857 = vunpack.c.l.b16 %v1744
  %v1858 = vunpack.c.h.b16 %v1744
  %v1859 = vunpack.c.l.b16 %v1745
  %v1860 = vunpack.c.h.b16 %v1745
  %v1861 = vunpack.c.l.b16 %v1746
  %v1862 = vunpack.c.h.b16 %v1746
  %v1863 = vunpack.c.l.b16 %v1747
  %v1864 = vunpack.c.h.b16 %v1747
  %v1865 = vunpack.c.l.b16 %v1748
  %v1866 = vunpack.c.h.b16 %v1748
  %v1867 = vunpack.c.l.b16 %v1749
  %v1868 = vunpack.c.h.b16 %v1749
  %v1869 = vunpack.c.l.b16 %v1750
  %v1870 = vunpack.c.h.b16 %v1750
  %v1871 = vunpack.c.l.b16 %v1751
  %v1872 = vunpack.c.h.b16 %v1751
  %v1873 = vunpack.c.l.b16 %v1752
  %v1874 = vunpack.c.h.b16 %v1752
  %v1875 = vunpack.c.l.b16 %v1753
  %v1876 = vunpack.c.h.b16 %v1753
  %v1877 = vunpack.c.l.b16 %v1754
  %v1878 = vunpack.c.h.b16 %v1754
  %v1879 = vunpack.c.l.b16 %v1755
  %v1880 = vunpack.c.h.b16 %v1755
  %v1881 = vunpack.c.l.b16 %v1756
  %v1882 = vunpack.c.h.b16 %v1756
  %v1883 = vunpack.c.l.b16 %v1757
  %v1884 = vunpack.c.h.b16 %v1757
  %v1885 = vunpack.c.l.b16 %v1758
  %v1886 = vunpack.c.h.b16 %v1758
  %v1887 = vunpack.c.l.b16 %v1759
  %v1888 = vunpack.c.h.b16 %v1759
  %v1889 = vunpack.c.l.b16 %v1760
  %v1890 = vunpack.c.h.b16 %v1760
  %v1891 = vunpack.c.l.b16 %v1761
  %v1892 = vunpack.c.h.b16 %v1761
  %v1893 = vunpack.c.l.b16 %v1762
  %v1894 = vunpack.c.h.b16 %v1762
  %v1895 = vunpack.c.l.b16 %v1763
  %v1896 = vunpack.c.h.b16 %v1763
  %v1897 = vunpack.c.l.b16 %v1764
  %v1898 = vunpack.c.h.b16 %v1764
  %v1899 = vunpack.c.l.b16 %v1765
  %v1900 = vunpack.c.h.b16 %v1765
  %v1901 = vunpack.c.l.b16 %v1766
  %v1902 = vunpack.c.h.b16 %v1766
  %v1903 = vunpack.c.l.b16 %v1767
  %v1904 = vunpack.c.h.b16 %v1767
  %v1905 = vunpack.c.l.b16 %v1768
  %v1906 = vunpack.c.h.b16 %v1768
  %v1907 = vunpack.c.l.b16 %v1769
  %v1908 = vunpack.c.h.b16 %v1769
  %v1909 = vunpack.c.l.b16 %v1770
  %v1910 = vunpack.c.h.b16 %v1770
  %v1911 = vunpack.c.l.b16 %v1771
  %v1912 = vunpack.c.h.b16 %v1771
  %v1913 = vunpack.c.l.b16 %v1772
  %v1914 = vunpack.c.h.b16 %v1772
  %v1915 = vunpack.c.l.b16 %v1773
  %v1916 = vunpack.c.h.b16 %v1773
  %v1917 = vunpack.c.l.b16 %v1774
  %v1918 = vunpack.c.h.b16 %v1774
  %v1919 = vunpack.c.l.b16 %v1775
  %v1920 = vunpack.c.h.b16 %v1775
  %v1921 = vunpack.c.l.b16 %v1776
  %v1922 = vunpack.c.h.b16 %v1776
  %v1923 = vunpack.c.l.b16 %v1777
  %v1924 = vunpack.c.h.b16 %v1777
  %v1925 = vunpack.c.l.b16 %v1778
  %v1926 = vunpack.c.h.b16 %v1778
  %v1927 = vunpack.c.l.b16 %v1779
  %v1928 = vunpack.c.h.b16 %v1779
  %v1929 = vunpack.c.l.b16 %v1780
  %v1930 = vunpack.c.h.b16 %v1780
  %v1931 = vpack.c.b16 %v1837, %v1835
  %v1932 = vpack.c.b16 %v1838, %v1836
  %v1933 = vpack.c.b16 %v1841, %v1839
  %v1934 = vpack.c.b16 %v1842, %v1840
  %v1935 = vpack.c.b16 %v1845, %v1843
  %v1936 = vpack.c.b16 %v1846, %v1844
  %v1937 = vpack.c.b16 %v1849, %v1847
  %v1938 = vpack.c.b16 %v1850, %v1848
  %v1939 = vpack.c.b16 %v1853, %v1851
  %v1940 = vpack.c.b16 %v1854, %v1852
  %v1941 = vpack.c.b16 %v1857, %v1855
  %v1942 = vpack.c.b16 %v1858, %v1856
  %v1943 = vpack.c.b16 %v1861, %v1859
  %v1944 = vpack.c.b16 %v1862, %v1860
  %v1945 = vpack.c.b16 %v1865, %v1863
  %v1946 = vpack.c.b16 %v1866, %v1864
  %v1947 = vpack.c.b16 %v1869, %v1867
  %v1948 = vpack.c.b16 %v1870, %v1868
  %v1949 = vpack.c.b16 %v1873, %v1871
  %v1950 = vpack.c.b16 %v1874, %v1872
  %v1951 = vpack.c.b16 %v1877, %v1875
  %v1952 = vpack.c.b16 %v1878, %v1876
  %v1953 = vpack.c.b16 %v1881, %v1879
  %v1954 = vpack.c.b16 %v1882, %v1880
  %v1955 = vpack.c.b16 %v1885, %v1883
  %v1956 = vpack.c.b16 %v1886, %v1884
  %v1957 = vpack.c.b16 %v1889, %v1887
  %v1958 = vpack.c.b16 %v1890, %v1888
  %v1959 = vpack.c.b16 %v1893, %v1891
  %v1960 = vpack.c.b16 %v1894, %v1892
  %v1961 = vpack.c.b16 %v1897, %v1895
  %v1962 = vpack.c.b16 %v1898, %v1896
  %v1963 = vpack.c.b16 %v1901, %v1899
  %v1964 = vpack.c.b16 %v1902, %v1900
  %v1965 = vpack.c.b16 %v1905, %v1903
  %v1966 = vpack.c.b16 %v1906, %v1904
  %v1967 = vpack.c.b16 %v1909, %v1907
  %v1968 = vpack.c.b16 %v1910, %v1908
  %v1969 = vpack.c.b16 %v1913, %v1911
  %v1970 = vpack.c.b16 %v1914, %v1912
  %v1971 = vpack.c.b16 %v1917, %v1915
  %v1972 = vpack.c.b16 %v1918, %v1916
  %v1973 = vpack.c.b16 %v1921, %v1919
  %v1974 = vpack.c.b16 %v1922, %v1920
  %v1975 = vpack.c.b16 %v1925, %v1923
  %v1976 = vpack.c.b16 %v1926, %v1924
  %v1977 = vpack.c.b16 %v1929, %v1927
  %v1978 = vpack.c.b16 %v1930, %v1928
  %2027 = vmatpush.bf16.msra.mxu0 %v1945
  %2028 = vmatpush.bf16.msra.mxu0 %v1943
  %2029 = vmatpush.bf16.msra.mxu0 %v1941
  %2030 = vmatpush.bf16.msra.mxu0 %v1939
  %2031 = vmatpush.bf16.msra.mxu0 %v1937
  %2032 = vmatpush.bf16.msra.mxu0 %v1935
  %2033 = vmatpush.bf16.msra.mxu0 %v1933
  %2034 = vmatpush.bf16.msra.mxu0 %v1931
  %2035 = vmatmul.bf16.gmra.mxu0 %v1730
  %v2036 = vpop.f32.mrf.mxu0
  %v2037 = vadd.f32 %v1783, %v2036
  %v2038 = vpop.f32.mrf.mxu0
  %2039 = vdwg.mxu0
  %2040 = vmatpush.bf16.msra.mxu0 %v1961
  %2041 = vmatpush.bf16.msra.mxu0 %v1959
  %2042 = vmatpush.bf16.msra.mxu0 %v1957
  %2043 = vmatpush.bf16.msra.mxu0 %v1955
  %2044 = vmatpush.bf16.msra.mxu0 %v1953
  %2045 = vmatpush.bf16.msra.mxu0 %v1951
  %2046 = vmatpush.bf16.msra.mxu0 %v1949
  %2047 = vmatpush.bf16.msra.mxu0 %v1947
  %2048 = vmatmul.bf16.gmra.mxu0 %v1731
  %v2049 = vpop.f32.mrf.mxu0
  %v2050 = vadd.f32 %v2037, %v2049
  %v2051 = vpop.f32.mrf.mxu0
  %2052 = vdwg.mxu0
  %2053 = vmatpush.bf16.msra.mxu0 %v1977
  %2054 = vmatpush.bf16.msra.mxu0 %v1975
  %2055 = vmatpush.bf16.msra.mxu0 %v1973
  %2056 = vmatpush.bf16.msra.mxu0 %v1971
  %2057 = vmatpush.bf16.msra.mxu0 %v1969
  %2058 = vmatpush.bf16.msra.mxu0 %v1967
  %2059 = vmatpush.bf16.msra.mxu0 %v1965
  %2060 = vmatpush.bf16.msra.mxu0 %v1963
  %2061 = vmatmul.bf16.gmra.mxu0 %v1732
  %v2062 = vpop.f32.mrf.mxu0
  %v2063 = vadd.f32 %v2050, %v2062
  %v2064 = vpop.f32.mrf.mxu0
  %2065 = vdwg.mxu0
  %2066 = vmatpush.bf16.msra.mxu0 %v1946
  %2067 = vmatpush.bf16.msra.mxu0 %v1944
  %2068 = vmatpush.bf16.msra.mxu0 %v1942
  %2069 = vmatpush.bf16.msra.mxu0 %v1940
  %2070 = vmatpush.bf16.msra.mxu0 %v1938
  %2071 = vmatpush.bf16.msra.mxu0 %v1936
  %2072 = vmatpush.bf16.msra.mxu0 %v1934
  %2073 = vmatpush.bf16.msra.mxu0 %v1932
  %2074 = vmatmul.bf16.gmra.mxu0 %v1730
  %v2075 = vpop.f32.mrf.mxu0
  %v2076 = vadd.f32 %v1784, %v2075
  %v2077 = vpop.f32.mrf.mxu0
  %2078 = vdwg.mxu0
  %2079 = vmatpush.bf16.msra.mxu0 %v1962
  %2080 = vmatpush.bf16.msra.mxu0 %v1960
  %2081 = vmatpush.bf16.msra.mxu0 %v1958
  %2082 = vmatpush.bf16.msra.mxu0 %v1956
  %2083 = vmatpush.bf16.msra.mxu0 %v1954
  %2084 = vmatpush.bf16.msra.mxu0 %v1952
  %2085 = vmatpush.bf16.msra.mxu0 %v1950
  %2086 = vmatpush.bf16.msra.mxu0 %v1948
  %2087 = vmatmul.bf16.gmra.mxu0 %v1731
  %v2088 = vpop.f32.mrf.mxu0
  %v2089 = vadd.f32 %v2076, %v2088
  %v2090 = vpop.f32.mrf.mxu0
  %2091 = vdwg.mxu0
  %2092 = vmatpush.bf16.msra.mxu0 %v1978
  %2093 = vmatpush.bf16.msra.mxu0 %v1976
  %2094 = vmatpush.bf16.msra.mxu0 %v1974
  %2095 = vmatpush.bf16.msra.mxu0 %v1972
  %2096 = vmatpush.bf16.msra.mxu0 %v1970
  %2097 = vmatpush.bf16.msra.mxu0 %v1968
  %2098 = vmatpush.bf16.msra.mxu0 %v1966
  %2099 = vmatpush.bf16.msra.mxu0 %v1964
  %2100 = vmatmul.bf16.gmra.mxu0 %v1732
  %v2101 = vpop.f32.mrf.mxu0
  %v2102 = vadd.f32 %v2089, %v2101
  %v2103 = vpop.f32.mrf.mxu0
  %2104 = vdwg.mxu0
  %vm2105 = vcmask 302336
  %v2106 = vsel %vm2105, %v2102, -inf
  %2107 = vmax.xlane.f32.xlu0 %v2106
  %v2108 = vpop.xlane.xlu0 %2107
  %v2109 = vsub.f32 %v2102, %v2108
  %v2110 = vmul.f32 %v2109, 1.442695
  %v2111 = vpow.pop %v2110
  %2113 = vrot.lane.b32.xlu0 %v2111, 96
  %v2114 = vpop.permute.xlu0 %2113
  %vm2116 = vcmask 39936
  %v2117 = vsel %vm2116, %v2114, 0.0
  %2118 = vadd.xlane.f32.xlu0 %v2117
  %v2119 = vpop.xlane.xlu0 %2118
  %v2120 = vrcp.pop %v2119
  %v2121 = vmul.f32 %v2111, %v2120
  %vm2122 = vcmp.gt.f32.partialorder %v2063, 0.0
  %vm2123 = vcmp.gt.f32.partialorder %v2102, 0.0
  %v2124 = vmul.f32 %v2063, 0.01
  %v2125 = vmul.f32 %v2102, 0.01
  %v2126 = vsel %vm2122, %v2063, %v2124
  %v2127 = vsel %vm2123, %v2102, %v2125
  %2129 = vset.pattern.permute.xlu0 32
  %2130 = vperm.xlu0 %2129, %v2121
  %v2131 = vpop.permute.xlu0 %2130
  %v2133 = vmul.f32 %v2131, %v2126
  %v2134 = vadd.f32 %v2133, 0.0
  %2135 = vset.pattern.permute.xlu0 33
  %2136 = vperm.xlu0 %2135, %v2121
  %v2137 = vpop.permute.xlu0 %2136
  %v2139 = vmul.f32 %v2137, %v2126
  %2141 = vrot.lane.b32.xlu0 %v2139, 96
  %v2142 = vpop.permute.xlu0 %2141
  %v2144 = vadd.f32 %v2134, %v2142
  %2145 = vset.pattern.permute.xlu0 34
  %2146 = vperm.xlu0 %2145, %v2121
  %v2147 = vpop.permute.xlu0 %2146
  %v2149 = vmul.f32 %v2147, %v2126
  %2151 = vrot.lane.b32.xlu0 %v2149, 64
  %v2152 = vpop.permute.xlu0 %2151
  %v2154 = vadd.f32 %v2144, %v2152
  %2155 = vset.pattern.permute.xlu0 35
  %2156 = vperm.xlu0 %2155, %v2121
  %v2157 = vpop.permute.xlu0 %2156
  %v2159 = vmul.f32 %v2157, %v2126
  %2161 = vrot.lane.b32.xlu0 %v2159, 32
  %v2162 = vpop.permute.xlu0 %2161
  %v2164 = vadd.f32 %v2154, %v2162
  %2165 = vset.pattern.permute.xlu0 36
  %2166 = vperm.xlu0 %2165, %v2121
  %v2167 = vpop.permute.xlu0 %2166
  %v2169 = vmul.f32 %v2167, %v2127
  %v2170 = vadd.f32 %v2164, %v2169
  %v2171 = vadd.f32 %v2170, %v1726
  %v2172 = vld [vmem:[%s9] sm:$0xf]
  %v2173 = vxor.u32 %v2172, 2147483648
  %v2174 = vmul.f32 %v2173, 1.442695
  %v2175 = vpow.pop %v2174
  %v2176 = vadd.f32 %v2175, 1.0
  %v2177 = vrcp.pop %v2176
  %v2178 = vmul.f32 %v2176, %v2177
  %v2179 = vsub.f32 1.0, %v2178
  %v2180 = vmul.f32 %v2177, %v2179
  %v2181 = vadd.f32 %v2177, %v2180
  %vm2182 = vweird.f32 %v2176
  %vm2183 = vweird.f32 %v2177
  %vm2184 = vmor %vm2182, %vm2183
  %v2185 = vsel %vm2184, %v2177, %v2181
  %v2186 = vand.u32 2147483647, %v2176
  %vm2187 = vcmp.eq.f32.partialorder %v2186, 8.507059e+37
  %v2188 = vand.u32 %v2176, 2147483648
  %v2189 = vor.u32 1.1754944e-38, %v2188
  %v2190 = vsel %vm2187, %v2189, %v2185
  %v2191 = vmul.f32 1.0, %v2190
  %v2193 = vrot.slane %v2191, 4
  %v2195 = vadd.f32 %v2170, %v2193
  %v2197 = vrot.slane %v2195, 4
  %v2199 = vsub.f32 %v2171, %v2197
  %v2200 = vpack.c.bf16 %v2199, %v2199
  %v2201 = vld [vmem:[%s12] sm:$0xff]
  %v2202 = vld [vmem:[%s12 + $0x8] sm:$0xff]
  %v2203 = vld [vmem:[%s12 + $0x10] sm:$0xff]
  %v2204 = vld [vmem:[%s12 + $0x18] sm:$0xff]
  %v2205 = vld [vmem:[%s12 + $0x20] sm:$0xff]
  %v2206 = vld [vmem:[%s12 + $0x28] sm:$0xff]
  %v2207 = vld [vmem:[%s12 + $0x30] sm:$0xff]
  %v2208 = vld [vmem:[%s12 + $0x38] sm:$0xff]
  %v2209 = vld [vmem:[%s13] sm:$0xf]
  %v2211 = vperm.slane %v2209, 0
  %v2212 = vperm.slane %v2209, 1
  %v2213 = vperm.slane %v2209, 2
  %v2214 = vperm.slane %v2209, 3
  %v2227 = vunpack.c.l.b16 %v2201
  %v2228 = vunpack.c.h.b16 %v2201
  %v2229 = vunpack.c.l.b16 %v2202
  %v2230 = vunpack.c.h.b16 %v2202
  %v2231 = vunpack.c.l.b16 %v2203
  %v2232 = vunpack.c.h.b16 %v2203
  %v2233 = vunpack.c.l.b16 %v2204
  %v2234 = vunpack.c.h.b16 %v2204
  %v2235 = vunpack.c.l.b16 %v2205
  %v2236 = vunpack.c.h.b16 %v2205
  %v2237 = vunpack.c.l.b16 %v2206
  %v2238 = vunpack.c.h.b16 %v2206
  %v2239 = vunpack.c.l.b16 %v2207
  %v2240 = vunpack.c.h.b16 %v2207
  %v2241 = vunpack.c.l.b16 %v2208
  %v2242 = vunpack.c.h.b16 %v2208
  %v2243 = vpack.c.b16 %v2231, %v2227
  %v2244 = vpack.c.b16 %v2232, %v2228
  %v2245 = vpack.c.b16 %v2233, %v2229
  %v2246 = vpack.c.b16 %v2234, %v2230
  %v2247 = vpack.c.b16 %v2239, %v2235
  %v2248 = vpack.c.b16 %v2240, %v2236
  %v2249 = vpack.c.b16 %v2241, %v2237
  %v2250 = vpack.c.b16 %v2242, %v2238
  %v2260 = vsel %vm1593, %v2200, 0
  %2262 = vmatpush.bf16.msra.mxu0 0
  %2263 = vmatpush.bf16.msra.mxu0 0
  %2264 = vmatpush.bf16.msra.mxu0 0
  %2265 = vmatpush.bf16.msra.mxu0 0
  %2266 = vmatpush.bf16.msra.mxu0 0
  %2267 = vmatpush.bf16.msra.mxu0 0
  %2268 = vmatpush.bf16.msra.mxu0 %v2247
  %2269 = vmatpush.bf16.msra.mxu0 %v2243
  %2270 = vmatmul.bf16.gmra.mxu0 %v2260
  %v2271 = vpop.f32.mrf.mxu0
  %v2272 = vadd.f32 %v2211, %v2271
  %v2273 = vpop.f32.mrf.mxu0
  %2274 = vdwg.mxu0
  %2275 = vmatpush.bf16.msra.mxu0 0
  %2276 = vmatpush.bf16.msra.mxu0 0
  %2277 = vmatpush.bf16.msra.mxu0 0
  %2278 = vmatpush.bf16.msra.mxu0 0
  %2279 = vmatpush.bf16.msra.mxu0 0
  %2280 = vmatpush.bf16.msra.mxu0 0
  %2281 = vmatpush.bf16.msra.mxu0 %v2248
  %2282 = vmatpush.bf16.msra.mxu0 %v2244
  %2283 = vmatmul.bf16.gmra.mxu0 %v2260
  %v2284 = vpop.f32.mrf.mxu0
  %v2285 = vadd.f32 %v2212, %v2284
  %v2286 = vpop.f32.mrf.mxu0
  %2287 = vdwg.mxu0
  %2288 = vmatpush.bf16.msra.mxu0 0
  %2289 = vmatpush.bf16.msra.mxu0 0
  %2290 = vmatpush.bf16.msra.mxu0 0
  %2291 = vmatpush.bf16.msra.mxu0 0
  %2292 = vmatpush.bf16.msra.mxu0 0
  %2293 = vmatpush.bf16.msra.mxu0 0
  %2294 = vmatpush.bf16.msra.mxu0 %v2249
  %2295 = vmatpush.bf16.msra.mxu0 %v2245
  %2296 = vmatmul.bf16.gmra.mxu0 %v2260
  %v2297 = vpop.f32.mrf.mxu0
  %v2298 = vadd.f32 %v2213, %v2297
  %v2299 = vpop.f32.mrf.mxu0
  %2300 = vdwg.mxu0
  %2301 = vmatpush.bf16.msra.mxu0 0
  %2302 = vmatpush.bf16.msra.mxu0 0
  %2303 = vmatpush.bf16.msra.mxu0 0
  %2304 = vmatpush.bf16.msra.mxu0 0
  %2305 = vmatpush.bf16.msra.mxu0 0
  %2306 = vmatpush.bf16.msra.mxu0 0
  %2307 = vmatpush.bf16.msra.mxu0 %v2250
  %2308 = vmatpush.bf16.msra.mxu0 %v2246
  %2309 = vmatmul.bf16.gmra.mxu0 %v2260
  %v2310 = vpop.f32.mrf.mxu0
  %v2311 = vadd.f32 %v2214, %v2310
  %v2312 = vpop.f32.mrf.mxu0
  %2313 = vdwg.mxu0
  %v2314 = vmax.f32 %v2272, 0.0
  %v2315 = vmax.f32 %v2285, 0.0
  %v2316 = vmax.f32 %v2298, 0.0
  %v2317 = vmax.f32 %v2311, 0.0
  %v2318 = vpack.c.bf16 %v2314, %v2314
  %v2319 = vpack.c.bf16 %v2315, %v2315
  %v2320 = vpack.c.bf16 %v2316, %v2316
  %v2321 = vpack.c.bf16 %v2317, %v2317
  %v2322 = vld [vmem:[%s14] sm:$0xf]
  %v2323 = vld [vmem:[%s14 + $0x4] sm:$0xf]
  %v2324 = vld [vmem:[%s14 + $0x8] sm:$0xf]
  %v2325 = vld [vmem:[%s14 + $0xc] sm:$0xf]
  %v2326 = vld [vmem:[%s14 + $0x10] sm:$0xf]
  %v2327 = vld [vmem:[%s14 + $0x14] sm:$0xf]
  %v2328 = vld [vmem:[%s14 + $0x18] sm:$0xf]
  %v2329 = vld [vmem:[%s14 + $0x1c] sm:$0xf]
  %v2330 = vld [vmem:[%s14 + $0x20] sm:$0xf]
  %v2331 = vld [vmem:[%s14 + $0x24] sm:$0xf]
  %v2332 = vld [vmem:[%s14 + $0x28] sm:$0xf]
  %v2333 = vld [vmem:[%s14 + $0x2c] sm:$0xf]
  %v2334 = vld [vmem:[%s14 + $0x30] sm:$0xf]
  %v2335 = vld [vmem:[%s14 + $0x34] sm:$0xf]
  %v2336 = vld [vmem:[%s14 + $0x38] sm:$0xf]
  %v2337 = vld [vmem:[%s14 + $0x3c] sm:$0xf]
  %v2338 = vld [vmem:[%s14 + $0x40] sm:$0xf]
  %v2339 = vld [vmem:[%s14 + $0x44] sm:$0xf]
  %v2340 = vld [vmem:[%s14 + $0x48] sm:$0xf]
  %v2341 = vld [vmem:[%s14 + $0x4c] sm:$0xf]
  %v2342 = vld [vmem:[%s14 + $0x50] sm:$0xf]
  %v2343 = vld [vmem:[%s14 + $0x54] sm:$0xf]
  %v2344 = vld [vmem:[%s14 + $0x58] sm:$0xf]
  %v2345 = vld [vmem:[%s14 + $0x5c] sm:$0xf]
  %v2346 = vld [vmem:[%s14 + $0x60] sm:$0xf]
  %v2347 = vld [vmem:[%s14 + $0x64] sm:$0xf]
  %v2348 = vld [vmem:[%s14 + $0x68] sm:$0xf]
  %v2349 = vld [vmem:[%s14 + $0x6c] sm:$0xf]
  %v2350 = vld [vmem:[%s14 + $0x70] sm:$0xf]
  %v2351 = vld [vmem:[%s14 + $0x74] sm:$0xf]
  %v2352 = vld [vmem:[%s14 + $0x78] sm:$0xf]
  %v2353 = vld [vmem:[%s14 + $0x7c] sm:$0xf]
  %v2354 = vld [vmem:[%s14 + $0x80] sm:$0xf]
  %v2355 = vld [vmem:[%s14 + $0x84] sm:$0xf]
  %v2356 = vld [vmem:[%s14 + $0x88] sm:$0xf]
  %v2357 = vld [vmem:[%s14 + $0x8c] sm:$0xf]
  %v2358 = vld [vmem:[%s14 + $0x90] sm:$0xf]
  %v2359 = vld [vmem:[%s14 + $0x94] sm:$0xf]
  %v2360 = vld [vmem:[%s14 + $0x98] sm:$0xf]
  %v2361 = vld [vmem:[%s14 + $0x9c] sm:$0xf]
  %v2362 = vld [vmem:[%s14 + $0xa0] sm:$0xf]
  %v2363 = vld [vmem:[%s14 + $0xa4] sm:$0xf]
  %v2364 = vld [vmem:[%s14 + $0xa8] sm:$0xf]
  %v2365 = vld [vmem:[%s14 + $0xac] sm:$0xf]
  %v2366 = vld [vmem:[%s14 + $0xb0] sm:$0xf]
  %v2367 = vld [vmem:[%s14 + $0xb4] sm:$0xf]
  %v2368 = vld [vmem:[%s14 + $0xb8] sm:$0xf]
  %v2369 = vld [vmem:[%s14 + $0xbc] sm:$0xf]
  %v2370 = vld [vmem:[%s14 + $0xc0] sm:$0xf]
  %v2371 = vld [vmem:[%s14 + $0xc4] sm:$0xf]
  %v2372 = vld [vmem:[%s14 + $0xc8] sm:$0xf]
  %v2373 = vld [vmem:[%s14 + $0xcc] sm:$0xf]
  %v2374 = vld [vmem:[%s14 + $0xd0] sm:$0xf]
  %v2375 = vld [vmem:[%s14 + $0xd4] sm:$0xf]
  %v2376 = vld [vmem:[%s14 + $0xd8] sm:$0xf]
  %v2377 = vld [vmem:[%s14 + $0xdc] sm:$0xf]
  %v2378 = vld [vmem:[%s14 + $0xe0] sm:$0xf]
  %v2379 = vld [vmem:[%s14 + $0xe4] sm:$0xf]
  %v2380 = vld [vmem:[%s14 + $0xe8] sm:$0xf]
  %v2381 = vld [vmem:[%s14 + $0xec] sm:$0xf]
  %v2382 = vld [vmem:[%s14 + $0xf0] sm:$0xf]
  %v2383 = vld [vmem:[%s14 + $0xf4] sm:$0xf]
  %v2384 = vld [vmem:[%s14 + $0xf8] sm:$0xf]
  %v2385 = vld [vmem:[%s14 + $0xfc] sm:$0xf]
  %v2386 = vld [vmem:[#allocation2] sm:$0x1]
  %v2388 = vperm.slane %v2386, 0
  %v2454 = vunpack.c.l.b16 %v2322
  %v2455 = vunpack.c.l.b16 %v2323
  %v2456 = vunpack.c.l.b16 %v2324
  %v2457 = vunpack.c.l.b16 %v2325
  %v2458 = vunpack.c.l.b16 %v2326
  %v2459 = vunpack.c.l.b16 %v2327
  %v2460 = vunpack.c.l.b16 %v2328
  %v2461 = vunpack.c.l.b16 %v2329
  %v2462 = vunpack.c.l.b16 %v2330
  %v2463 = vunpack.c.l.b16 %v2331
  %v2464 = vunpack.c.l.b16 %v2332
  %v2465 = vunpack.c.l.b16 %v2333
  %v2466 = vunpack.c.l.b16 %v2334
  %v2467 = vunpack.c.l.b16 %v2335
  %v2468 = vunpack.c.l.b16 %v2336
  %v2469 = vunpack.c.l.b16 %v2337
  %v2470 = vunpack.c.l.b16 %v2338
  %v2471 = vunpack.c.l.b16 %v2339
  %v2472 = vunpack.c.l.b16 %v2340
  %v2473 = vunpack.c.l.b16 %v2341
  %v2474 = vunpack.c.l.b16 %v2342
  %v2475 = vunpack.c.l.b16 %v2343
  %v2476 = vunpack.c.l.b16 %v2344
  %v2477 = vunpack.c.l.b16 %v2345
  %v2478 = vunpack.c.l.b16 %v2346
  %v2479 = vunpack.c.l.b16 %v2347
  %v2480 = vunpack.c.l.b16 %v2348
  %v2481 = vunpack.c.l.b16 %v2349
  %v2482 = vunpack.c.l.b16 %v2350
  %v2483 = vunpack.c.l.b16 %v2351
  %v2484 = vunpack.c.l.b16 %v2352
  %v2485 = vunpack.c.l.b16 %v2353
  %v2486 = vunpack.c.l.b16 %v2354
  %v2487 = vunpack.c.l.b16 %v2355
  %v2488 = vunpack.c.l.b16 %v2356
  %v2489 = vunpack.c.l.b16 %v2357
  %v2490 = vunpack.c.l.b16 %v2358
  %v2491 = vunpack.c.l.b16 %v2359
  %v2492 = vunpack.c.l.b16 %v2360
  %v2493 = vunpack.c.l.b16 %v2361
  %v2494 = vunpack.c.l.b16 %v2362
  %v2495 = vunpack.c.l.b16 %v2363
  %v2496 = vunpack.c.l.b16 %v2364
  %v2497 = vunpack.c.l.b16 %v2365
  %v2498 = vunpack.c.l.b16 %v2366
  %v2499 = vunpack.c.l.b16 %v2367
  %v2500 = vunpack.c.l.b16 %v2368
  %v2501 = vunpack.c.l.b16 %v2369
  %v2502 = vunpack.c.l.b16 %v2370
  %v2503 = vunpack.c.l.b16 %v2371
  %v2504 = vunpack.c.l.b16 %v2372
  %v2505 = vunpack.c.l.b16 %v2373
  %v2506 = vunpack.c.l.b16 %v2374
  %v2507 = vunpack.c.l.b16 %v2375
  %v2508 = vunpack.c.l.b16 %v2376
  %v2509 = vunpack.c.l.b16 %v2377
  %v2510 = vunpack.c.l.b16 %v2378
  %v2511 = vunpack.c.l.b16 %v2379
  %v2512 = vunpack.c.l.b16 %v2380
  %v2513 = vunpack.c.l.b16 %v2381
  %v2514 = vunpack.c.l.b16 %v2382
  %v2515 = vunpack.c.l.b16 %v2383
  %v2516 = vunpack.c.l.b16 %v2384
  %v2517 = vunpack.c.l.b16 %v2385
  %v2518 = vpack.c.b16 %v2455, %v2454
  %v2519 = vpack.c.b16 %v2457, %v2456
  %v2520 = vpack.c.b16 %v2459, %v2458
  %v2521 = vpack.c.b16 %v2461, %v2460
  %v2522 = vpack.c.b16 %v2463, %v2462
  %v2523 = vpack.c.b16 %v2465, %v2464
  %v2524 = vpack.c.b16 %v2467, %v2466
  %v2525 = vpack.c.b16 %v2469, %v2468
  %v2526 = vpack.c.b16 %v2471, %v2470
  %v2527 = vpack.c.b16 %v2473, %v2472
  %v2528 = vpack.c.b16 %v2475, %v2474
  %v2529 = vpack.c.b16 %v2477, %v2476
  %v2530 = vpack.c.b16 %v2479, %v2478
  %v2531 = vpack.c.b16 %v2481, %v2480
  %v2532 = vpack.c.b16 %v2483, %v2482
  %v2533 = vpack.c.b16 %v2485, %v2484
  %v2534 = vpack.c.b16 %v2487, %v2486
  %v2535 = vpack.c.b16 %v2489, %v2488
  %v2536 = vpack.c.b16 %v2491, %v2490
  %v2537 = vpack.c.b16 %v2493, %v2492
  %v2538 = vpack.c.b16 %v2495, %v2494
  %v2539 = vpack.c.b16 %v2497, %v2496
  %v2540 = vpack.c.b16 %v2499, %v2498
  %v2541 = vpack.c.b16 %v2501, %v2500
  %v2542 = vpack.c.b16 %v2503, %v2502
  %v2543 = vpack.c.b16 %v2505, %v2504
  %v2544 = vpack.c.b16 %v2507, %v2506
  %v2545 = vpack.c.b16 %v2509, %v2508
  %v2546 = vpack.c.b16 %v2511, %v2510
  %v2547 = vpack.c.b16 %v2513, %v2512
  %v2548 = vpack.c.b16 %v2515, %v2514
  %v2549 = vpack.c.b16 %v2517, %v2516
  %2582 = vmatpush.bf16.msra.mxu0 %v2525
  %2583 = vmatpush.bf16.msra.mxu0 %v2524
  %2584 = vmatpush.bf16.msra.mxu0 %v2523
  %2585 = vmatpush.bf16.msra.mxu0 %v2522
  %2586 = vmatpush.bf16.msra.mxu0 %v2521
  %2587 = vmatpush.bf16.msra.mxu0 %v2520
  %2588 = vmatpush.bf16.msra.mxu0 %v2519
  %2589 = vmatpush.bf16.msra.mxu0 %v2518
  %2590 = vmatmul.bf16.gmra.mxu0 %v2318
  %v2591 = vpop.f32.mrf.mxu0
  %v2592 = vadd.f32 %v2388, %v2591
  %v2593 = vpop.f32.mrf.mxu0
  %2594 = vdwg.mxu0
  %2595 = vmatpush.bf16.msra.mxu0 %v2533
  %2596 = vmatpush.bf16.msra.mxu0 %v2532
  %2597 = vmatpush.bf16.msra.mxu0 %v2531
  %2598 = vmatpush.bf16.msra.mxu0 %v2530
  %2599 = vmatpush.bf16.msra.mxu0 %v2529
  %2600 = vmatpush.bf16.msra.mxu0 %v2528
  %2601 = vmatpush.bf16.msra.mxu0 %v2527
  %2602 = vmatpush.bf16.msra.mxu0 %v2526
  %2603 = vmatmul.bf16.gmra.mxu0 %v2319
  %v2604 = vpop.f32.mrf.mxu0
  %v2605 = vadd.f32 %v2592, %v2604
  %v2606 = vpop.f32.mrf.mxu0
  %2607 = vdwg.mxu0
  %2608 = vmatpush.bf16.msra.mxu0 %v2541
  %2609 = vmatpush.bf16.msra.mxu0 %v2540
  %2610 = vmatpush.bf16.msra.mxu0 %v2539
  %2611 = vmatpush.bf16.msra.mxu0 %v2538
  %2612 = vmatpush.bf16.msra.mxu0 %v2537
  %2613 = vmatpush.bf16.msra.mxu0 %v2536
  %2614 = vmatpush.bf16.msra.mxu0 %v2535
  %2615 = vmatpush.bf16.msra.mxu0 %v2534
  %2616 = vmatmul.bf16.gmra.mxu0 %v2320
  %v2617 = vpop.f32.mrf.mxu0
  %v2618 = vadd.f32 %v2605, %v2617
  %v2619 = vpop.f32.mrf.mxu0
  %2620 = vdwg.mxu0
  %2621 = vmatpush.bf16.msra.mxu0 %v2549
  %2622 = vmatpush.bf16.msra.mxu0 %v2548
  %2623 = vmatpush.bf16.msra.mxu0 %v2547
  %2624 = vmatpush.bf16.msra.mxu0 %v2546
  %2625 = vmatpush.bf16.msra.mxu0 %v2545
  %2626 = vmatpush.bf16.msra.mxu0 %v2544
  %2627 = vmatpush.bf16.msra.mxu0 %v2543
  %2628 = vmatpush.bf16.msra.mxu0 %v2542
  %2629 = vmatmul.bf16.gmra.mxu0 %v2321
  %v2630 = vpop.f32.mrf.mxu0
  %v2631 = vadd.f32 %v2618, %v2630
  %v2632 = vpop.f32.mrf.mxu0
  %2633 = vdwg.mxu0
  %v2634 = vxor.u32 %v2631, 2147483648
  %v2635 = vmul.f32 %v2634, 1.442695
  %v2636 = vpow.pop %v2635
  %v2637 = vadd.f32 %v2636, 1.0
  %v2638 = vrcp.pop %v2637
  %v2639 = vmul.f32 %v2637, %v2638
  %v2640 = vsub.f32 1.0, %v2639
  %v2641 = vmul.f32 %v2638, %v2640
  %v2642 = vadd.f32 %v2638, %v2641
  %vm2643 = vweird.f32 %v2637
  %vm2644 = vweird.f32 %v2638
  %vm2645 = vmor %vm2643, %vm2644
  %v2646 = vsel %vm2645, %v2638, %v2642
  %v2647 = vand.u32 2147483647, %v2637
  %vm2648 = vcmp.eq.f32.partialorder %v2647, 8.507059e+37
  %v2649 = vand.u32 %v2637, 2147483648
  %v2650 = vor.u32 1.1754944e-38, %v2649
  %v2651 = vsel %vm2648, %v2650, %v2646
  %v2652 = vmul.f32 1.0, %v2651
  %2654 = vset.pattern.permute.xlu0 0
  %2655 = vperm.xlu0 %2654, %v2652
  %v2656 = vpop.permute.xlu0 %2655
  %v2658 = vsel %vm1593, %v2171, %v2656
  %vm2659 = vcmask 519168
  %2660 = vst.msk [vmem:[%s16] sm:$0xf] %vm2659, %v2658
  // Predicated region
  $region66: #{lamdanet_forward.1} parent=0 // pred_check
    _
  $region67: #{lamdanet_forward.1} parent=0 // pred_check_branch
    %2662 = sbr.rel (0) target = $region69
  $region68: #{lamdanet_forward.1} parent=0 // pred_region
    _
  $region69: #{lamdanet_forward.1} parent=0 // pred_fallthru
    _
  // Predicated region
  $region70: #{lamdanet_forward.1} parent=0 // pred_check
    _
  $region71: #{lamdanet_forward.1} parent=0 // pred_check_branch
    %2664 = sbr.rel (0) target = $region73
  $region72: #{lamdanet_forward.1} parent=0 // pred_region
    _
  $region73: #{lamdanet_forward.1} parent=0 // pred_fallthru
    _

</llo_original>
